<compile_context>
chip_gen: v5e
topology: v5e:2x2
jax: 0.10.0
libtpu: 0.0.40
codegen_flags: <defaults>
</compile_context>

<pallas_src>
import jax
import jax.numpy as jnp
import numpy as np
from jax import lax
from jax.experimental import pallas as pl
from jax.experimental.pallas import tpu as pltpu

C1 = 8        # conv1 out channels
C2 = 16       # conv2 out channels == LSTM1 input size
H1_LSTM = 32  # LSTM1 hidden
H2_LSTM = 64  # LSTM2 hidden
FC_PAD = 128  # lane-padded fc1 output width


def _cell(pre, c, hs):
    """Fused LSTM cell. pre: (B, 4*hs) gate pre-activations with column order
    (i, f, o, g): one sigmoid over a contiguous 3*hs slice, one tanh over hs."""
    sig = jax.nn.sigmoid(pre[:, :3 * hs])
    i = sig[:, 0 * hs:1 * hs]
    f = sig[:, 1 * hs:2 * hs]
    o = sig[:, 2 * hs:3 * hs]
    g = jnp.tanh(pre[:, 3 * hs:])
    c_new = f * c + i * g
    h_new = o * jnp.tanh(c_new)
    return h_new, c_new


def _kernel(xe_ref, xo_ref, w1_ref, w2_ref,
            wih1_ref, whh1_ref, b1_ref,
            w2cat_ref, b2_ref,
            wfc_ref, bfc_ref, out_ref):
    B = out_ref.shape[0]
    Hp = xe_ref.shape[0] // B - 1   # pooled height
    T = Hp - 2                      # conv2 output height == LSTM sequence length
    HB = Hp * B
    TB = T * B

    xe = xe_ref[...]   # ((Hp+1)*B, 3): even input rows, batch-interleaved (row j*B + b)
    xo = xo_ref[...]   # ((Hp+1)*B, 3): odd input rows, same interleave

    # ---- Phase 1: conv1 + ReLU with MaxPool folded in -----------------------
    # Even/odd conv-output rows are built as two im2col halves of one patch
    # matrix; pooling = elementwise max of the two matmul-output halves.
    # Patch column order is kh*3 + kw (matches w1 packing).
    p_even = jnp.concatenate([xe[:HB, :], xo[:HB, :], xe[B:HB + B, :]], axis=1)   # rows 2j..2j+2
    p_odd = jnp.concatenate([xo[:HB, :], xe[B:HB + B, :], xo[B:HB + B, :]], axis=1)  # rows 2j+1..2j+3
    p1 = jnp.concatenate([p_even, p_odd], axis=0)                                  # (2*HB, 9)
    h1 = jnp.maximum(jnp.dot(p1, w1_ref[...], preferred_element_type=jnp.float32), 0.0)
    pooled = jnp.maximum(h1[:HB, :], h1[HB:, :])                                   # (HB, 8), row j*B + b

    # conv2 + ReLU as one matmul; rows come out time-major (row t*B + b).
    # Patch column order is kh*8 + cin (matches w2 packing).
    p2 = jnp.concatenate(
        [pooled[:TB, :], pooled[B:TB + B, :], pooled[2 * B:TB + 2 * B, :]], axis=1)  # (TB, 24)
    feat = jnp.maximum(jnp.dot(p2, w2_ref[...], preferred_element_type=jnp.float32), 0.0)  # (TB, 16)

    # LSTM1 input projections for all T steps in one matmul, bias folded in.
    g1 = jnp.dot(feat, wih1_ref[...], preferred_element_type=jnp.float32) + b1_ref[...]    # (TB, 128)

    whh1 = whh1_ref[...]      # (32, 128)
    w2cat = w2cat_ref[...]    # (96, 256) = [Wih2; Whh2]
    b2v = jnp.broadcast_to(b2_ref[...], (B, 4 * H2_LSTM))   # hoisted out of the recurrence

    # ---- Phase 2: stacked LSTM recurrences, fully unrolled over T -----------
    # Per step: one matmul on the LSTM1 chain (h1 @ Whh1) and ONE fused matmul
    # for LSTM2 ([h1_new ‖ h2] @ [Wih2; Whh2]).
    # Note: full unroll is appropriate for small static T (<=16); for larger T
    # switch to lax.fori_loop(..., unroll=True) over chunks.
    h1s = jnp.zeros((B, H1_LSTM), jnp.float32)
    c1s = jnp.zeros((B, H1_LSTM), jnp.float32)
    h2s = jnp.zeros((B, H2_LSTM), jnp.float32)
    c2s = jnp.zeros((B, H2_LSTM), jnp.float32)
    for t in range(T):
        pre1 = g1[t * B:(t + 1) * B, :] + jnp.dot(h1s, whh1,
                                                  preferred_element_type=jnp.float32)
        h1s, c1s = _cell(pre1, c1s, H1_LSTM)
        hh = jnp.concatenate([h1s, h2s], axis=1)                      # (B, 96)
        pre2 = jnp.dot(hh, w2cat, preferred_element_type=jnp.float32) + b2v
        h2s, c2s = _cell(pre2, c2s, H2_LSTM)

    # ---- fc1 on the last hidden state (lane-padded to 128 for a full vst) ---
    out_ref[...] = (jnp.dot(h2s, wfc_ref[...], preferred_element_type=jnp.float32)
                    + bfc_ref[...]).astype(out_ref.dtype)


def _pack_lstm(wih, whh, b):
    """wih:(4,in,hs) whh:(4,hs,hs) b:(4,1,hs) in PyTorch gate order (i,f,g,o).
    Pack columns as (i, f, o, g) -> (in,4hs), (hs,4hs), (1,4hs)."""
    order = (0, 1, 3, 2)
    wih_p = jnp.concatenate([wih[k] for k in order], axis=1).astype(jnp.float32)
    whh_p = jnp.concatenate([whh[k] for k in order], axis=1).astype(jnp.float32)
    b_p = jnp.concatenate([b[k] for k in order], axis=1).astype(jnp.float32)
    return wih_p, whh_p, b_p


def cnnlstm_forward(x, params):
    """x: (B, 1, H, W) NCHW with W == 3. Returns (B, output_size) float32."""
    B, C, H, W = x.shape
    assert C == 1 and W == 3, "CNNLSTM_01 requires a single-channel input with W == 3"
    Hc1 = H - 2
    Hp = Hc1 // 2
    T = Hp - 2
    assert T >= 1
    out_size = params["wfc"].shape[1]
    assert out_size <= FC_PAD

    # ---- host-side layout plumbing (no compute hoisted) ---------------------
    # Split input rows into even/odd streams, batch-interleaved (row j*B + b),
    # so the kernel's im2col is pure contiguous slicing and conv outputs come
    # out time-major. Pack LSTM gate columns (i,f,o,g); concatenate LSTM2's
    # input/recurrent weights; lane-pad fc1.
    x3 = x.reshape(B, H, W).astype(jnp.float32)
    rows = (Hp + 1) * B
    x_ei = jnp.transpose(x3[:, 0::2, :], (1, 0, 2)).reshape(-1, W)[:rows]
    x_oi = jnp.transpose(x3[:, 1::2, :], (1, 0, 2)).reshape(-1, W)[:rows]

    w1p = params["w1"].reshape(3 * 3, C1).astype(jnp.float32)       # (9, 8)  row = kh*3 + kw
    w2p = params["w2"].reshape(3 * C1, C2).astype(jnp.float32)      # (24, 16) row = kh*8 + cin
    wih1p, whh1p, b1p = _pack_lstm(params["wih1"], params["whh1"], params["b1"])
    wih2p, whh2p, b2p = _pack_lstm(params["wih2"], params["whh2"], params["b2"])
    w2cat = jnp.concatenate([wih2p, whh2p], axis=0)                 # (96, 256)

    wfc = jnp.zeros((H2_LSTM, FC_PAD), jnp.float32).at[:, :out_size].set(
        params["wfc"].astype(jnp.float32))
    bfc = jnp.zeros((1, FC_PAD), jnp.float32).at[:, :out_size].set(
        params["bfc"].astype(jnp.float32))

    args = (x_ei, x_oi, w1p, w2p, wih1p, whh1p, b1p, w2cat, b2p, wfc, bfc)

    out = pl.pallas_call(
        _kernel,
        out_shape=jax.ShapeDtypeStruct((B, FC_PAD), jnp.float32),
        in_specs=[pl.BlockSpec(memory_space=pltpu.MemorySpace.VMEM) for _ in args],
        out_specs=pl.BlockSpec(memory_space=pltpu.MemorySpace.VMEM),
    )(*args)
    return out[:, :out_size]


def init_params(key, output_size):
    """Deterministic synthetic parameters (PyTorch-default-like uniform init)."""
    ks = jax.random.split(key, 12)

    def u(k, shape, fan_in):
        bound = 1.0 / np.sqrt(fan_in)
        return jax.random.uniform(k, shape, jnp.float32, -bound, bound)

    return {
        "w1":   u(ks[0], (3, 3, 1, C1), 9),            # Conv2d(1,8,(3,3)) weight as (kh,kw,in,out)
        "w2":   u(ks[1], (3, C1, C2), 3 * C1),         # Conv2d(8,16,(3,1)) weight as (kh,in,out)
        "wih1": u(ks[2], (4, C2, H1_LSTM), H1_LSTM),
        "whh1": u(ks[3], (4, H1_LSTM, H1_LSTM), H1_LSTM),
        "b1":   u(ks[4], (4, 1, H1_LSTM), H1_LSTM) + u(ks[5], (4, 1, H1_LSTM), H1_LSTM),
        "wih2": u(ks[6], (4, H1_LSTM, H2_LSTM), H2_LSTM),
        "whh2": u(ks[7], (4, H2_LSTM, H2_LSTM), H2_LSTM),
        "b2":   u(ks[8], (4, 1, H2_LSTM), H2_LSTM) + u(ks[9], (4, 1, H2_LSTM), H2_LSTM),
        "wfc":  u(ks[10], (H2_LSTM, output_size), H2_LSTM),
        "bfc":  u(ks[11], (1, output_size), H2_LSTM),
    }


def _ref_lstm_cell(x_t, h, c, wih, whh, b):
    """Per-gate reference cell (PyTorch gate order i, f, g, o)."""
    def gate(k):
        return (jnp.dot(x_t, wih[k], preferred_element_type=jnp.float32)
                + jnp.dot(h, whh[k], preferred_element_type=jnp.float32)
                + b[k])
    i = jax.nn.sigmoid(gate(0))
    f = jax.nn.sigmoid(gate(1))
    g = jnp.tanh(gate(2))
    o = jax.nn.sigmoid(gate(3))
    c_new = f * c + i * g
    h_new = o * jnp.tanh(c_new)
    return h_new, c_new


def reference_forward(x, params):
    """Pure-JAX reference reproducing the PyTorch forward semantics."""
    w1 = jnp.transpose(params["w1"], (3, 2, 0, 1))          # OIHW (8,1,3,3)
    out = lax.conv_general_dilated(x.astype(jnp.float32), w1, (1, 1), "VALID",
                                   dimension_numbers=("NCHW", "OIHW", "NCHW"))
    out = jnp.maximum(out, 0.0)
    out = lax.reduce_window(out, -jnp.inf, lax.max,
                            window_dimensions=(1, 1, 2, 1),
                            window_strides=(1, 1, 2, 2),
                            padding="VALID")
    w2 = jnp.transpose(params["w2"], (2, 1, 0))[..., None]  # OIHW (16,8,3,1)
    out = lax.conv_general_dilated(out, w2, (1, 1), "VALID",
                                   dimension_numbers=("NCHW", "OIHW", "NCHW"))
    out = jnp.maximum(out, 0.0)
    out = jnp.squeeze(out, 3)                 # (B, 16, T)
    out = jnp.transpose(out, (0, 2, 1))       # (B, T, 16)

    def run_lstm(xs_tbd, wih, whh, b, hs):
        def step(carry, x_t):
            h, c = carry
            h, c = _ref_lstm_cell(x_t, h, c, wih, whh, b)
            return (h, c), h
        h0 = jnp.zeros((xs_tbd.shape[1], hs), jnp.float32)
        _, h_all = lax.scan(step, (h0, h0), xs_tbd)
        return h_all                          # (T, B, hs)

    xs = jnp.transpose(out, (1, 0, 2))        # (T, B, 16)
    h1_all = run_lstm(xs, params["wih1"], params["whh1"], params["b1"], H1_LSTM)
    h2_all = run_lstm(h1_all, params["wih2"], params["whh2"], params["b2"], H2_LSTM)
    last = h2_all[-1]                         # (B, 64)
    return jnp.dot(last, params["wfc"]) + params["bfc"]


if __name__ == "__main__":
    key = jax.random.PRNGKey(0)
    kx, kp = jax.random.split(key)

    # Small shapes consistent with the module: input_length = 22 -> seq len T = 8.
    B, H, W = 2, 22, 3
    output_size = 5

    x = jax.random.normal(kx, (B, 1, H, W), jnp.float32)
    params = init_params(kp, output_size)

    out = cnnlstm_forward(x, params)
    out = jax.block_until_ready(out)

    ref = reference_forward(x, params)
    np.testing.assert_allclose(np.asarray(out), np.asarray(ref), rtol=1e-3, atol=1e-3)

    print("KERNEL_OK")
</pallas_src>

<mosaic_0001>
module attributes {stable_mosaic.version = 11 : i64} {
  func.func @_kernel(%arg0: memref<22x3xf32, #tpu.memory_space<vmem>>, %arg1: memref<22x3xf32, #tpu.memory_space<vmem>>, %arg2: memref<9x8xf32, #tpu.memory_space<vmem>>, %arg3: memref<24x16xf32, #tpu.memory_space<vmem>>, %arg4: memref<16x128xf32, #tpu.memory_space<vmem>>, %arg5: memref<32x128xf32, #tpu.memory_space<vmem>>, %arg6: memref<1x128xf32, #tpu.memory_space<vmem>>, %arg7: memref<96x256xf32, #tpu.memory_space<vmem>>, %arg8: memref<1x256xf32, #tpu.memory_space<vmem>>, %arg9: memref<64x128xf32, #tpu.memory_space<vmem>>, %arg10: memref<1x128xf32, #tpu.memory_space<vmem>>, %arg11: memref<2x128xf32, #tpu.memory_space<vmem>>) attributes {dimension_semantics = [], scalar_prefetch = 0 : i64, scratch_operands = 0 : i64, tpu.core_type = #tpu.core_type<tc>} {
    %c0 = arith.constant 0 : index
    %c0_0 = arith.constant 0 : index
    %0 = vector.load %arg0[%c0, %c0_0] : memref<22x3xf32, #tpu.memory_space<vmem>>, vector<22x3xf32>
    %c0_1 = arith.constant 0 : index
    %c0_2 = arith.constant 0 : index
    %1 = vector.load %arg1[%c0_1, %c0_2] : memref<22x3xf32, #tpu.memory_space<vmem>>, vector<22x3xf32>
    %2 = vector.extract_strided_slice %0 {offsets = [0, 0], sizes = [20, 3], strides = [1, 1]} : vector<22x3xf32> to vector<20x3xf32>
    %3 = vector.extract_strided_slice %1 {offsets = [0, 0], sizes = [20, 3], strides = [1, 1]} : vector<22x3xf32> to vector<20x3xf32>
    %4 = vector.extract_strided_slice %0 {offsets = [2, 0], sizes = [20, 3], strides = [1, 1]} : vector<22x3xf32> to vector<20x3xf32>
    %5 = tpu.concatenate %2, %3, %4 in 1 : vector<20x3xf32>, vector<20x3xf32>, vector<20x3xf32> -> vector<20x9xf32>
    %6 = vector.extract_strided_slice %1 {offsets = [0, 0], sizes = [20, 3], strides = [1, 1]} : vector<22x3xf32> to vector<20x3xf32>
    %7 = vector.extract_strided_slice %0 {offsets = [2, 0], sizes = [20, 3], strides = [1, 1]} : vector<22x3xf32> to vector<20x3xf32>
    %8 = vector.extract_strided_slice %1 {offsets = [2, 0], sizes = [20, 3], strides = [1, 1]} : vector<22x3xf32> to vector<20x3xf32>
    %9 = tpu.concatenate %6, %7, %8 in 1 : vector<20x3xf32>, vector<20x3xf32>, vector<20x3xf32> -> vector<20x9xf32>
    %10 = tpu.concatenate %5, %9 in 0 : vector<20x9xf32>, vector<20x9xf32> -> vector<40x9xf32>
    %c0_3 = arith.constant 0 : index
    %c0_4 = arith.constant 0 : index
    %11 = vector.load %arg2[%c0_3, %c0_4] : memref<9x8xf32, #tpu.memory_space<vmem>>, vector<9x8xf32>
    %cst = arith.constant dense<0.000000e+00> : vector<40x8xf32>
    %12 = tpu.matmul %10, %11, %cst {dimension_numbers = #tpu.dot_dimension_numbers<[1], [0], [0], [1], [0, 0, 1, 1], [], []>} : vector<40x9xf32>, vector<9x8xf32>, vector<40x8xf32> -> vector<40x8xf32>
    %cst_5 = arith.constant 0.000000e+00 : f32
    %13 = vector.broadcast %cst_5 : f32 to vector<40x8xf32>
    %14 = arith.maximumf %12, %13 : vector<40x8xf32>
    %15 = vector.extract_strided_slice %14 {offsets = [0, 0], sizes = [20, 8], strides = [1, 1]} : vector<40x8xf32> to vector<20x8xf32>
    %16 = vector.extract_strided_slice %14 {offsets = [20, 0], sizes = [20, 8], strides = [1, 1]} : vector<40x8xf32> to vector<20x8xf32>
    %17 = arith.maximumf %15, %16 : vector<20x8xf32>
    %18 = vector.extract_strided_slice %17 {offsets = [0, 0], sizes = [16, 8], strides = [1, 1]} : vector<20x8xf32> to vector<16x8xf32>
    %19 = vector.extract_strided_slice %17 {offsets = [2, 0], sizes = [16, 8], strides = [1, 1]} : vector<20x8xf32> to vector<16x8xf32>
    %20 = vector.extract_strided_slice %17 {offsets = [4, 0], sizes = [16, 8], strides = [1, 1]} : vector<20x8xf32> to vector<16x8xf32>
    %21 = tpu.concatenate %18, %19, %20 in 1 : vector<16x8xf32>, vector<16x8xf32>, vector<16x8xf32> -> vector<16x24xf32>
    %c0_6 = arith.constant 0 : index
    %c0_7 = arith.constant 0 : index
    %22 = vector.load %arg3[%c0_6, %c0_7] : memref<24x16xf32, #tpu.memory_space<vmem>>, vector<24x16xf32>
    %cst_8 = arith.constant dense<0.000000e+00> : vector<16x16xf32>
    %23 = tpu.matmul %21, %22, %cst_8 {dimension_numbers = #tpu.dot_dimension_numbers<[1], [0], [0], [1], [0, 0, 1, 1], [], []>} : vector<16x24xf32>, vector<24x16xf32>, vector<16x16xf32> -> vector<16x16xf32>
    %cst_9 = arith.constant 0.000000e+00 : f32
    %24 = vector.broadcast %cst_9 : f32 to vector<16x16xf32>
    %25 = arith.maximumf %23, %24 : vector<16x16xf32>
    %c0_10 = arith.constant 0 : index
    %c0_11 = arith.constant 0 : index
    %26 = vector.load %arg4[%c0_10, %c0_11] : memref<16x128xf32, #tpu.memory_space<vmem>>, vector<16x128xf32>
    %cst_12 = arith.constant dense<0.000000e+00> : vector<16x128xf32>
    %27 = tpu.matmul %25, %26, %cst_12 {dimension_numbers = #tpu.dot_dimension_numbers<[1], [0], [0], [1], [0, 0, 1, 1], [], []>} : vector<16x16xf32>, vector<16x128xf32>, vector<16x128xf32> -> vector<16x128xf32>
    %c0_13 = arith.constant 0 : index
    %c0_14 = arith.constant 0 : index
    %28 = vector.load %arg6[%c0_13, %c0_14] : memref<1x128xf32, #tpu.memory_space<vmem>>, vector<1x128xf32>
    %29 = vector.broadcast %28 : vector<1x128xf32> to vector<16x128xf32>
    %30 = arith.addf %27, %29 : vector<16x128xf32>
    %c0_15 = arith.constant 0 : index
    %c0_16 = arith.constant 0 : index
    %31 = vector.load %arg5[%c0_15, %c0_16] : memref<32x128xf32, #tpu.memory_space<vmem>>, vector<32x128xf32>
    %c0_17 = arith.constant 0 : index
    %c0_18 = arith.constant 0 : index
    %32 = vector.load %arg7[%c0_17, %c0_18] : memref<96x256xf32, #tpu.memory_space<vmem>>, vector<96x256xf32>
    %c0_19 = arith.constant 0 : index
    %c0_20 = arith.constant 0 : index
    %33 = vector.load %arg8[%c0_19, %c0_20] : memref<1x256xf32, #tpu.memory_space<vmem>>, vector<1x256xf32>
    %34 = vector.shape_cast %33 : vector<1x256xf32> to vector<1x256xf32>
    %35 = vector.broadcast %34 : vector<1x256xf32> to vector<2x256xf32>
    %cst_21 = arith.constant 0.000000e+00 : f32
    %36 = vector.broadcast %cst_21 : f32 to vector<2x32xf32>
    %cst_22 = arith.constant 0.000000e+00 : f32
    %37 = vector.broadcast %cst_22 : f32 to vector<2x32xf32>
    %cst_23 = arith.constant 0.000000e+00 : f32
    %38 = vector.broadcast %cst_23 : f32 to vector<2x64xf32>
    %cst_24 = arith.constant 0.000000e+00 : f32
    %39 = vector.broadcast %cst_24 : f32 to vector<2x64xf32>
    %40 = vector.extract_strided_slice %30 {offsets = [0, 0], sizes = [2, 128], strides = [1, 1]} : vector<16x128xf32> to vector<2x128xf32>
    %cst_25 = arith.constant dense<0.000000e+00> : vector<2x128xf32>
    %41 = tpu.matmul %36, %31, %cst_25 {dimension_numbers = #tpu.dot_dimension_numbers<[1], [0], [0], [1], [0, 0, 1, 1], [], []>} : vector<2x32xf32>, vector<32x128xf32>, vector<2x128xf32> -> vector<2x128xf32>
    %42 = arith.addf %40, %41 : vector<2x128xf32>
    %43 = vector.extract_strided_slice %42 {offsets = [0, 0], sizes = [2, 96], strides = [1, 1]} : vector<2x128xf32> to vector<2x96xf32>
    %44 = arith.negf %43 : vector<2x96xf32>
    %45 = math.exp %44 : vector<2x96xf32>
    %cst_26 = arith.constant 1.000000e+00 : f32
    %46 = vector.broadcast %cst_26 : f32 to vector<2x96xf32>
    %47 = arith.addf %46, %45 : vector<2x96xf32>
    %48 = arith.divf %46, %47 : vector<2x96xf32>
    %49 = vector.extract_strided_slice %48 {offsets = [0, 0], sizes = [2, 32], strides = [1, 1]} : vector<2x96xf32> to vector<2x32xf32>
    %50 = vector.extract_strided_slice %48 {offsets = [0, 32], sizes = [2, 32], strides = [1, 1]} : vector<2x96xf32> to vector<2x32xf32>
    %51 = vector.extract_strided_slice %48 {offsets = [0, 64], sizes = [2, 32], strides = [1, 1]} : vector<2x96xf32> to vector<2x32xf32>
    %52 = vector.extract_strided_slice %42 {offsets = [0, 96], sizes = [2, 32], strides = [1, 1]} : vector<2x128xf32> to vector<2x32xf32>
    %53 = math.tanh %52 : vector<2x32xf32>
    %54 = arith.mulf %50, %37 : vector<2x32xf32>
    %55 = arith.mulf %49, %53 : vector<2x32xf32>
    %56 = arith.addf %54, %55 : vector<2x32xf32>
    %57 = math.tanh %56 : vector<2x32xf32>
    %58 = arith.mulf %51, %57 : vector<2x32xf32>
    %59 = tpu.concatenate %58, %38 in 1 : vector<2x32xf32>, vector<2x64xf32> -> vector<2x96xf32>
    %cst_27 = arith.constant dense<0.000000e+00> : vector<2x256xf32>
    %60 = tpu.matmul %59, %32, %cst_27 {dimension_numbers = #tpu.dot_dimension_numbers<[1], [0], [0], [1], [0, 0, 1, 1], [], []>} : vector<2x96xf32>, vector<96x256xf32>, vector<2x256xf32> -> vector<2x256xf32>
    %61 = arith.addf %60, %35 : vector<2x256xf32>
    %62 = vector.extract_strided_slice %61 {offsets = [0, 0], sizes = [2, 192], strides = [1, 1]} : vector<2x256xf32> to vector<2x192xf32>
    %63 = arith.negf %62 : vector<2x192xf32>
    %64 = math.exp %63 : vector<2x192xf32>
    %cst_28 = arith.constant 1.000000e+00 : f32
    %65 = vector.broadcast %cst_28 : f32 to vector<2x192xf32>
    %66 = arith.addf %65, %64 : vector<2x192xf32>
    %67 = arith.divf %65, %66 : vector<2x192xf32>
    %68 = vector.extract_strided_slice %67 {offsets = [0, 0], sizes = [2, 64], strides = [1, 1]} : vector<2x192xf32> to vector<2x64xf32>
    %69 = vector.extract_strided_slice %67 {offsets = [0, 64], sizes = [2, 64], strides = [1, 1]} : vector<2x192xf32> to vector<2x64xf32>
    %70 = vector.extract_strided_slice %67 {offsets = [0, 128], sizes = [2, 64], strides = [1, 1]} : vector<2x192xf32> to vector<2x64xf32>
    %71 = vector.extract_strided_slice %61 {offsets = [0, 192], sizes = [2, 64], strides = [1, 1]} : vector<2x256xf32> to vector<2x64xf32>
    %72 = math.tanh %71 : vector<2x64xf32>
    %73 = arith.mulf %69, %39 : vector<2x64xf32>
    %74 = arith.mulf %68, %72 : vector<2x64xf32>
    %75 = arith.addf %73, %74 : vector<2x64xf32>
    %76 = math.tanh %75 : vector<2x64xf32>
    %77 = arith.mulf %70, %76 : vector<2x64xf32>
    %78 = vector.extract_strided_slice %30 {offsets = [2, 0], sizes = [2, 128], strides = [1, 1]} : vector<16x128xf32> to vector<2x128xf32>
    %cst_29 = arith.constant dense<0.000000e+00> : vector<2x128xf32>
    %79 = tpu.matmul %58, %31, %cst_29 {dimension_numbers = #tpu.dot_dimension_numbers<[1], [0], [0], [1], [0, 0, 1, 1], [], []>} : vector<2x32xf32>, vector<32x128xf32>, vector<2x128xf32> -> vector<2x128xf32>
    %80 = arith.addf %78, %79 : vector<2x128xf32>
    %81 = vector.extract_strided_slice %80 {offsets = [0, 0], sizes = [2, 96], strides = [1, 1]} : vector<2x128xf32> to vector<2x96xf32>
    %82 = arith.negf %81 : vector<2x96xf32>
    %83 = math.exp %82 : vector<2x96xf32>
    %cst_30 = arith.constant 1.000000e+00 : f32
    %84 = vector.broadcast %cst_30 : f32 to vector<2x96xf32>
    %85 = arith.addf %84, %83 : vector<2x96xf32>
    %86 = arith.divf %84, %85 : vector<2x96xf32>
    %87 = vector.extract_strided_slice %86 {offsets = [0, 0], sizes = [2, 32], strides = [1, 1]} : vector<2x96xf32> to vector<2x32xf32>
    %88 = vector.extract_strided_slice %86 {offsets = [0, 32], sizes = [2, 32], strides = [1, 1]} : vector<2x96xf32> to vector<2x32xf32>
    %89 = vector.extract_strided_slice %86 {offsets = [0, 64], sizes = [2, 32], strides = [1, 1]} : vector<2x96xf32> to vector<2x32xf32>
    %90 = vector.extract_strided_slice %80 {offsets = [0, 96], sizes = [2, 32], strides = [1, 1]} : vector<2x128xf32> to vector<2x32xf32>
    %91 = math.tanh %90 : vector<2x32xf32>
    %92 = arith.mulf %88, %56 : vector<2x32xf32>
    %93 = arith.mulf %87, %91 : vector<2x32xf32>
    %94 = arith.addf %92, %93 : vector<2x32xf32>
    %95 = math.tanh %94 : vector<2x32xf32>
    %96 = arith.mulf %89, %95 : vector<2x32xf32>
    %97 = tpu.concatenate %96, %77 in 1 : vector<2x32xf32>, vector<2x64xf32> -> vector<2x96xf32>
    %cst_31 = arith.constant dense<0.000000e+00> : vector<2x256xf32>
    %98 = tpu.matmul %97, %32, %cst_31 {dimension_numbers = #tpu.dot_dimension_numbers<[1], [0], [0], [1], [0, 0, 1, 1], [], []>} : vector<2x96xf32>, vector<96x256xf32>, vector<2x256xf32> -> vector<2x256xf32>
    %99 = arith.addf %98, %35 : vector<2x256xf32>
    %100 = vector.extract_strided_slice %99 {offsets = [0, 0], sizes = [2, 192], strides = [1, 1]} : vector<2x256xf32> to vector<2x192xf32>
    %101 = arith.negf %100 : vector<2x192xf32>
    %102 = math.exp %101 : vector<2x192xf32>
    %cst_32 = arith.constant 1.000000e+00 : f32
    %103 = vector.broadcast %cst_32 : f32 to vector<2x192xf32>
    %104 = arith.addf %103, %102 : vector<2x192xf32>
    %105 = arith.divf %103, %104 : vector<2x192xf32>
    %106 = vector.extract_strided_slice %105 {offsets = [0, 0], sizes = [2, 64], strides = [1, 1]} : vector<2x192xf32> to vector<2x64xf32>
    %107 = vector.extract_strided_slice %105 {offsets = [0, 64], sizes = [2, 64], strides = [1, 1]} : vector<2x192xf32> to vector<2x64xf32>
    %108 = vector.extract_strided_slice %105 {offsets = [0, 128], sizes = [2, 64], strides = [1, 1]} : vector<2x192xf32> to vector<2x64xf32>
    %109 = vector.extract_strided_slice %99 {offsets = [0, 192], sizes = [2, 64], strides = [1, 1]} : vector<2x256xf32> to vector<2x64xf32>
    %110 = math.tanh %109 : vector<2x64xf32>
    %111 = arith.mulf %107, %75 : vector<2x64xf32>
    %112 = arith.mulf %106, %110 : vector<2x64xf32>
    %113 = arith.addf %111, %112 : vector<2x64xf32>
    %114 = math.tanh %113 : vector<2x64xf32>
    %115 = arith.mulf %108, %114 : vector<2x64xf32>
    %116 = vector.extract_strided_slice %30 {offsets = [4, 0], sizes = [2, 128], strides = [1, 1]} : vector<16x128xf32> to vector<2x128xf32>
    %cst_33 = arith.constant dense<0.000000e+00> : vector<2x128xf32>
    %117 = tpu.matmul %96, %31, %cst_33 {dimension_numbers = #tpu.dot_dimension_numbers<[1], [0], [0], [1], [0, 0, 1, 1], [], []>} : vector<2x32xf32>, vector<32x128xf32>, vector<2x128xf32> -> vector<2x128xf32>
    %118 = arith.addf %116, %117 : vector<2x128xf32>
    %119 = vector.extract_strided_slice %118 {offsets = [0, 0], sizes = [2, 96], strides = [1, 1]} : vector<2x128xf32> to vector<2x96xf32>
    %120 = arith.negf %119 : vector<2x96xf32>
    %121 = math.exp %120 : vector<2x96xf32>
    %cst_34 = arith.constant 1.000000e+00 : f32
    %122 = vector.broadcast %cst_34 : f32 to vector<2x96xf32>
    %123 = arith.addf %122, %121 : vector<2x96xf32>
    %124 = arith.divf %122, %123 : vector<2x96xf32>
    %125 = vector.extract_strided_slice %124 {offsets = [0, 0], sizes = [2, 32], strides = [1, 1]} : vector<2x96xf32> to vector<2x32xf32>
    %126 = vector.extract_strided_slice %124 {offsets = [0, 32], sizes = [2, 32], strides = [1, 1]} : vector<2x96xf32> to vector<2x32xf32>
    %127 = vector.extract_strided_slice %124 {offsets = [0, 64], sizes = [2, 32], strides = [1, 1]} : vector<2x96xf32> to vector<2x32xf32>
    %128 = vector.extract_strided_slice %118 {offsets = [0, 96], sizes = [2, 32], strides = [1, 1]} : vector<2x128xf32> to vector<2x32xf32>
    %129 = math.tanh %128 : vector<2x32xf32>
    %130 = arith.mulf %126, %94 : vector<2x32xf32>
    %131 = arith.mulf %125, %129 : vector<2x32xf32>
    %132 = arith.addf %130, %131 : vector<2x32xf32>
    %133 = math.tanh %132 : vector<2x32xf32>
    %134 = arith.mulf %127, %133 : vector<2x32xf32>
    %135 = tpu.concatenate %134, %115 in 1 : vector<2x32xf32>, vector<2x64xf32> -> vector<2x96xf32>
    %cst_35 = arith.constant dense<0.000000e+00> : vector<2x256xf32>
    %136 = tpu.matmul %135, %32, %cst_35 {dimension_numbers = #tpu.dot_dimension_numbers<[1], [0], [0], [1], [0, 0, 1, 1], [], []>} : vector<2x96xf32>, vector<96x256xf32>, vector<2x256xf32> -> vector<2x256xf32>
    %137 = arith.addf %136, %35 : vector<2x256xf32>
    %138 = vector.extract_strided_slice %137 {offsets = [0, 0], sizes = [2, 192], strides = [1, 1]} : vector<2x256xf32> to vector<2x192xf32>
    %139 = arith.negf %138 : vector<2x192xf32>
    %140 = math.exp %139 : vector<2x192xf32>
    %cst_36 = arith.constant 1.000000e+00 : f32
    %141 = vector.broadcast %cst_36 : f32 to vector<2x192xf32>
    %142 = arith.addf %141, %140 : vector<2x192xf32>
    %143 = arith.divf %141, %142 : vector<2x192xf32>
    %144 = vector.extract_strided_slice %143 {offsets = [0, 0], sizes = [2, 64], strides = [1, 1]} : vector<2x192xf32> to vector<2x64xf32>
    %145 = vector.extract_strided_slice %143 {offsets = [0, 64], sizes = [2, 64], strides = [1, 1]} : vector<2x192xf32> to vector<2x64xf32>
    %146 = vector.extract_strided_slice %143 {offsets = [0, 128], sizes = [2, 64], strides = [1, 1]} : vector<2x192xf32> to vector<2x64xf32>
    %147 = vector.extract_strided_slice %137 {offsets = [0, 192], sizes = [2, 64], strides = [1, 1]} : vector<2x256xf32> to vector<2x64xf32>
    %148 = math.tanh %147 : vector<2x64xf32>
    %149 = arith.mulf %145, %113 : vector<2x64xf32>
    %150 = arith.mulf %144, %148 : vector<2x64xf32>
    %151 = arith.addf %149, %150 : vector<2x64xf32>
    %152 = math.tanh %151 : vector<2x64xf32>
    %153 = arith.mulf %146, %152 : vector<2x64xf32>
    %154 = vector.extract_strided_slice %30 {offsets = [6, 0], sizes = [2, 128], strides = [1, 1]} : vector<16x128xf32> to vector<2x128xf32>
    %cst_37 = arith.constant dense<0.000000e+00> : vector<2x128xf32>
    %155 = tpu.matmul %134, %31, %cst_37 {dimension_numbers = #tpu.dot_dimension_numbers<[1], [0], [0], [1], [0, 0, 1, 1], [], []>} : vector<2x32xf32>, vector<32x128xf32>, vector<2x128xf32> -> vector<2x128xf32>
    %156 = arith.addf %154, %155 : vector<2x128xf32>
    %157 = vector.extract_strided_slice %156 {offsets = [0, 0], sizes = [2, 96], strides = [1, 1]} : vector<2x128xf32> to vector<2x96xf32>
    %158 = arith.negf %157 : vector<2x96xf32>
    %159 = math.exp %158 : vector<2x96xf32>
    %cst_38 = arith.constant 1.000000e+00 : f32
    %160 = vector.broadcast %cst_38 : f32 to vector<2x96xf32>
    %161 = arith.addf %160, %159 : vector<2x96xf32>
    %162 = arith.divf %160, %161 : vector<2x96xf32>
    %163 = vector.extract_strided_slice %162 {offsets = [0, 0], sizes = [2, 32], strides = [1, 1]} : vector<2x96xf32> to vector<2x32xf32>
    %164 = vector.extract_strided_slice %162 {offsets = [0, 32], sizes = [2, 32], strides = [1, 1]} : vector<2x96xf32> to vector<2x32xf32>
    %165 = vector.extract_strided_slice %162 {offsets = [0, 64], sizes = [2, 32], strides = [1, 1]} : vector<2x96xf32> to vector<2x32xf32>
    %166 = vector.extract_strided_slice %156 {offsets = [0, 96], sizes = [2, 32], strides = [1, 1]} : vector<2x128xf32> to vector<2x32xf32>
    %167 = math.tanh %166 : vector<2x32xf32>
    %168 = arith.mulf %164, %132 : vector<2x32xf32>
    %169 = arith.mulf %163, %167 : vector<2x32xf32>
    %170 = arith.addf %168, %169 : vector<2x32xf32>
    %171 = math.tanh %170 : vector<2x32xf32>
    %172 = arith.mulf %165, %171 : vector<2x32xf32>
    %173 = tpu.concatenate %172, %153 in 1 : vector<2x32xf32>, vector<2x64xf32> -> vector<2x96xf32>
    %cst_39 = arith.constant dense<0.000000e+00> : vector<2x256xf32>
    %174 = tpu.matmul %173, %32, %cst_39 {dimension_numbers = #tpu.dot_dimension_numbers<[1], [0], [0], [1], [0, 0, 1, 1], [], []>} : vector<2x96xf32>, vector<96x256xf32>, vector<2x256xf32> -> vector<2x256xf32>
    %175 = arith.addf %174, %35 : vector<2x256xf32>
    %176 = vector.extract_strided_slice %175 {offsets = [0, 0], sizes = [2, 192], strides = [1, 1]} : vector<2x256xf32> to vector<2x192xf32>
    %177 = arith.negf %176 : vector<2x192xf32>
    %178 = math.exp %177 : vector<2x192xf32>
    %cst_40 = arith.constant 1.000000e+00 : f32
    %179 = vector.broadcast %cst_40 : f32 to vector<2x192xf32>
    %180 = arith.addf %179, %178 : vector<2x192xf32>
    %181 = arith.divf %179, %180 : vector<2x192xf32>
    %182 = vector.extract_strided_slice %181 {offsets = [0, 0], sizes = [2, 64], strides = [1, 1]} : vector<2x192xf32> to vector<2x64xf32>
    %183 = vector.extract_strided_slice %181 {offsets = [0, 64], sizes = [2, 64], strides = [1, 1]} : vector<2x192xf32> to vector<2x64xf32>
    %184 = vector.extract_strided_slice %181 {offsets = [0, 128], sizes = [2, 64], strides = [1, 1]} : vector<2x192xf32> to vector<2x64xf32>
    %185 = vector.extract_strided_slice %175 {offsets = [0, 192], sizes = [2, 64], strides = [1, 1]} : vector<2x256xf32> to vector<2x64xf32>
    %186 = math.tanh %185 : vector<2x64xf32>
    %187 = arith.mulf %183, %151 : vector<2x64xf32>
    %188 = arith.mulf %182, %186 : vector<2x64xf32>
    %189 = arith.addf %187, %188 : vector<2x64xf32>
    %190 = math.tanh %189 : vector<2x64xf32>
    %191 = arith.mulf %184, %190 : vector<2x64xf32>
    %192 = vector.extract_strided_slice %30 {offsets = [8, 0], sizes = [2, 128], strides = [1, 1]} : vector<16x128xf32> to vector<2x128xf32>
    %cst_41 = arith.constant dense<0.000000e+00> : vector<2x128xf32>
    %193 = tpu.matmul %172, %31, %cst_41 {dimension_numbers = #tpu.dot_dimension_numbers<[1], [0], [0], [1], [0, 0, 1, 1], [], []>} : vector<2x32xf32>, vector<32x128xf32>, vector<2x128xf32> -> vector<2x128xf32>
    %194 = arith.addf %192, %193 : vector<2x128xf32>
    %195 = vector.extract_strided_slice %194 {offsets = [0, 0], sizes = [2, 96], strides = [1, 1]} : vector<2x128xf32> to vector<2x96xf32>
    %196 = arith.negf %195 : vector<2x96xf32>
    %197 = math.exp %196 : vector<2x96xf32>
    %cst_42 = arith.constant 1.000000e+00 : f32
    %198 = vector.broadcast %cst_42 : f32 to vector<2x96xf32>
    %199 = arith.addf %198, %197 : vector<2x96xf32>
    %200 = arith.divf %198, %199 : vector<2x96xf32>
    %201 = vector.extract_strided_slice %200 {offsets = [0, 0], sizes = [2, 32], strides = [1, 1]} : vector<2x96xf32> to vector<2x32xf32>
    %202 = vector.extract_strided_slice %200 {offsets = [0, 32], sizes = [2, 32], strides = [1, 1]} : vector<2x96xf32> to vector<2x32xf32>
    %203 = vector.extract_strided_slice %200 {offsets = [0, 64], sizes = [2, 32], strides = [1, 1]} : vector<2x96xf32> to vector<2x32xf32>
    %204 = vector.extract_strided_slice %194 {offsets = [0, 96], sizes = [2, 32], strides = [1, 1]} : vector<2x128xf32> to vector<2x32xf32>
    %205 = math.tanh %204 : vector<2x32xf32>
    %206 = arith.mulf %202, %170 : vector<2x32xf32>
    %207 = arith.mulf %201, %205 : vector<2x32xf32>
    %208 = arith.addf %206, %207 : vector<2x32xf32>
    %209 = math.tanh %208 : vector<2x32xf32>
    %210 = arith.mulf %203, %209 : vector<2x32xf32>
    %211 = tpu.concatenate %210, %191 in 1 : vector<2x32xf32>, vector<2x64xf32> -> vector<2x96xf32>
    %cst_43 = arith.constant dense<0.000000e+00> : vector<2x256xf32>
    %212 = tpu.matmul %211, %32, %cst_43 {dimension_numbers = #tpu.dot_dimension_numbers<[1], [0], [0], [1], [0, 0, 1, 1], [], []>} : vector<2x96xf32>, vector<96x256xf32>, vector<2x256xf32> -> vector<2x256xf32>
    %213 = arith.addf %212, %35 : vector<2x256xf32>
    %214 = vector.extract_strided_slice %213 {offsets = [0, 0], sizes = [2, 192], strides = [1, 1]} : vector<2x256xf32> to vector<2x192xf32>
    %215 = arith.negf %214 : vector<2x192xf32>
    %216 = math.exp %215 : vector<2x192xf32>
    %cst_44 = arith.constant 1.000000e+00 : f32
    %217 = vector.broadcast %cst_44 : f32 to vector<2x192xf32>
    %218 = arith.addf %217, %216 : vector<2x192xf32>
    %219 = arith.divf %217, %218 : vector<2x192xf32>
    %220 = vector.extract_strided_slice %219 {offsets = [0, 0], sizes = [2, 64], strides = [1, 1]} : vector<2x192xf32> to vector<2x64xf32>
    %221 = vector.extract_strided_slice %219 {offsets = [0, 64], sizes = [2, 64], strides = [1, 1]} : vector<2x192xf32> to vector<2x64xf32>
    %222 = vector.extract_strided_slice %219 {offsets = [0, 128], sizes = [2, 64], strides = [1, 1]} : vector<2x192xf32> to vector<2x64xf32>
    %223 = vector.extract_strided_slice %213 {offsets = [0, 192], sizes = [2, 64], strides = [1, 1]} : vector<2x256xf32> to vector<2x64xf32>
    %224 = math.tanh %223 : vector<2x64xf32>
    %225 = arith.mulf %221, %189 : vector<2x64xf32>
    %226 = arith.mulf %220, %224 : vector<2x64xf32>
    %227 = arith.addf %225, %226 : vector<2x64xf32>
    %228 = math.tanh %227 : vector<2x64xf32>
    %229 = arith.mulf %222, %228 : vector<2x64xf32>
    %230 = vector.extract_strided_slice %30 {offsets = [10, 0], sizes = [2, 128], strides = [1, 1]} : vector<16x128xf32> to vector<2x128xf32>
    %cst_45 = arith.constant dense<0.000000e+00> : vector<2x128xf32>
    %231 = tpu.matmul %210, %31, %cst_45 {dimension_numbers = #tpu.dot_dimension_numbers<[1], [0], [0], [1], [0, 0, 1, 1], [], []>} : vector<2x32xf32>, vector<32x128xf32>, vector<2x128xf32> -> vector<2x128xf32>
    %232 = arith.addf %230, %231 : vector<2x128xf32>
    %233 = vector.extract_strided_slice %232 {offsets = [0, 0], sizes = [2, 96], strides = [1, 1]} : vector<2x128xf32> to vector<2x96xf32>
    %234 = arith.negf %233 : vector<2x96xf32>
    %235 = math.exp %234 : vector<2x96xf32>
    %cst_46 = arith.constant 1.000000e+00 : f32
    %236 = vector.broadcast %cst_46 : f32 to vector<2x96xf32>
    %237 = arith.addf %236, %235 : vector<2x96xf32>
    %238 = arith.divf %236, %237 : vector<2x96xf32>
    %239 = vector.extract_strided_slice %238 {offsets = [0, 0], sizes = [2, 32], strides = [1, 1]} : vector<2x96xf32> to vector<2x32xf32>
    %240 = vector.extract_strided_slice %238 {offsets = [0, 32], sizes = [2, 32], strides = [1, 1]} : vector<2x96xf32> to vector<2x32xf32>
    %241 = vector.extract_strided_slice %238 {offsets = [0, 64], sizes = [2, 32], strides = [1, 1]} : vector<2x96xf32> to vector<2x32xf32>
    %242 = vector.extract_strided_slice %232 {offsets = [0, 96], sizes = [2, 32], strides = [1, 1]} : vector<2x128xf32> to vector<2x32xf32>
    %243 = math.tanh %242 : vector<2x32xf32>
    %244 = arith.mulf %240, %208 : vector<2x32xf32>
    %245 = arith.mulf %239, %243 : vector<2x32xf32>
    %246 = arith.addf %244, %245 : vector<2x32xf32>
    %247 = math.tanh %246 : vector<2x32xf32>
    %248 = arith.mulf %241, %247 : vector<2x32xf32>
    %249 = tpu.concatenate %248, %229 in 1 : vector<2x32xf32>, vector<2x64xf32> -> vector<2x96xf32>
    %cst_47 = arith.constant dense<0.000000e+00> : vector<2x256xf32>
    %250 = tpu.matmul %249, %32, %cst_47 {dimension_numbers = #tpu.dot_dimension_numbers<[1], [0], [0], [1], [0, 0, 1, 1], [], []>} : vector<2x96xf32>, vector<96x256xf32>, vector<2x256xf32> -> vector<2x256xf32>
    %251 = arith.addf %250, %35 : vector<2x256xf32>
    %252 = vector.extract_strided_slice %251 {offsets = [0, 0], sizes = [2, 192], strides = [1, 1]} : vector<2x256xf32> to vector<2x192xf32>
    %253 = arith.negf %252 : vector<2x192xf32>
    %254 = math.exp %253 : vector<2x192xf32>
    %cst_48 = arith.constant 1.000000e+00 : f32
    %255 = vector.broadcast %cst_48 : f32 to vector<2x192xf32>
    %256 = arith.addf %255, %254 : vector<2x192xf32>
    %257 = arith.divf %255, %256 : vector<2x192xf32>
    %258 = vector.extract_strided_slice %257 {offsets = [0, 0], sizes = [2, 64], strides = [1, 1]} : vector<2x192xf32> to vector<2x64xf32>
    %259 = vector.extract_strided_slice %257 {offsets = [0, 64], sizes = [2, 64], strides = [1, 1]} : vector<2x192xf32> to vector<2x64xf32>
    %260 = vector.extract_strided_slice %257 {offsets = [0, 128], sizes = [2, 64], strides = [1, 1]} : vector<2x192xf32> to vector<2x64xf32>
    %261 = vector.extract_strided_slice %251 {offsets = [0, 192], sizes = [2, 64], strides = [1, 1]} : vector<2x256xf32> to vector<2x64xf32>
    %262 = math.tanh %261 : vector<2x64xf32>
    %263 = arith.mulf %259, %227 : vector<2x64xf32>
    %264 = arith.mulf %258, %262 : vector<2x64xf32>
    %265 = arith.addf %263, %264 : vector<2x64xf32>
    %266 = math.tanh %265 : vector<2x64xf32>
    %267 = arith.mulf %260, %266 : vector<2x64xf32>
    %268 = vector.extract_strided_slice %30 {offsets = [12, 0], sizes = [2, 128], strides = [1, 1]} : vector<16x128xf32> to vector<2x128xf32>
    %cst_49 = arith.constant dense<0.000000e+00> : vector<2x128xf32>
    %269 = tpu.matmul %248, %31, %cst_49 {dimension_numbers = #tpu.dot_dimension_numbers<[1], [0], [0], [1], [0, 0, 1, 1], [], []>} : vector<2x32xf32>, vector<32x128xf32>, vector<2x128xf32> -> vector<2x128xf32>
    %270 = arith.addf %268, %269 : vector<2x128xf32>
    %271 = vector.extract_strided_slice %270 {offsets = [0, 0], sizes = [2, 96], strides = [1, 1]} : vector<2x128xf32> to vector<2x96xf32>
    %272 = arith.negf %271 : vector<2x96xf32>
    %273 = math.exp %272 : vector<2x96xf32>
    %cst_50 = arith.constant 1.000000e+00 : f32
    %274 = vector.broadcast %cst_50 : f32 to vector<2x96xf32>
    %275 = arith.addf %274, %273 : vector<2x96xf32>
    %276 = arith.divf %274, %275 : vector<2x96xf32>
    %277 = vector.extract_strided_slice %276 {offsets = [0, 0], sizes = [2, 32], strides = [1, 1]} : vector<2x96xf32> to vector<2x32xf32>
    %278 = vector.extract_strided_slice %276 {offsets = [0, 32], sizes = [2, 32], strides = [1, 1]} : vector<2x96xf32> to vector<2x32xf32>
    %279 = vector.extract_strided_slice %276 {offsets = [0, 64], sizes = [2, 32], strides = [1, 1]} : vector<2x96xf32> to vector<2x32xf32>
    %280 = vector.extract_strided_slice %270 {offsets = [0, 96], sizes = [2, 32], strides = [1, 1]} : vector<2x128xf32> to vector<2x32xf32>
    %281 = math.tanh %280 : vector<2x32xf32>
    %282 = arith.mulf %278, %246 : vector<2x32xf32>
    %283 = arith.mulf %277, %281 : vector<2x32xf32>
    %284 = arith.addf %282, %283 : vector<2x32xf32>
    %285 = math.tanh %284 : vector<2x32xf32>
    %286 = arith.mulf %279, %285 : vector<2x32xf32>
    %287 = tpu.concatenate %286, %267 in 1 : vector<2x32xf32>, vector<2x64xf32> -> vector<2x96xf32>
    %cst_51 = arith.constant dense<0.000000e+00> : vector<2x256xf32>
    %288 = tpu.matmul %287, %32, %cst_51 {dimension_numbers = #tpu.dot_dimension_numbers<[1], [0], [0], [1], [0, 0, 1, 1], [], []>} : vector<2x96xf32>, vector<96x256xf32>, vector<2x256xf32> -> vector<2x256xf32>
    %289 = arith.addf %288, %35 : vector<2x256xf32>
    %290 = vector.extract_strided_slice %289 {offsets = [0, 0], sizes = [2, 192], strides = [1, 1]} : vector<2x256xf32> to vector<2x192xf32>
    %291 = arith.negf %290 : vector<2x192xf32>
    %292 = math.exp %291 : vector<2x192xf32>
    %cst_52 = arith.constant 1.000000e+00 : f32
    %293 = vector.broadcast %cst_52 : f32 to vector<2x192xf32>
    %294 = arith.addf %293, %292 : vector<2x192xf32>
    %295 = arith.divf %293, %294 : vector<2x192xf32>
    %296 = vector.extract_strided_slice %295 {offsets = [0, 0], sizes = [2, 64], strides = [1, 1]} : vector<2x192xf32> to vector<2x64xf32>
    %297 = vector.extract_strided_slice %295 {offsets = [0, 64], sizes = [2, 64], strides = [1, 1]} : vector<2x192xf32> to vector<2x64xf32>
    %298 = vector.extract_strided_slice %295 {offsets = [0, 128], sizes = [2, 64], strides = [1, 1]} : vector<2x192xf32> to vector<2x64xf32>
    %299 = vector.extract_strided_slice %289 {offsets = [0, 192], sizes = [2, 64], strides = [1, 1]} : vector<2x256xf32> to vector<2x64xf32>
    %300 = math.tanh %299 : vector<2x64xf32>
    %301 = arith.mulf %297, %265 : vector<2x64xf32>
    %302 = arith.mulf %296, %300 : vector<2x64xf32>
    %303 = arith.addf %301, %302 : vector<2x64xf32>
    %304 = math.tanh %303 : vector<2x64xf32>
    %305 = arith.mulf %298, %304 : vector<2x64xf32>
    %306 = vector.extract_strided_slice %30 {offsets = [14, 0], sizes = [2, 128], strides = [1, 1]} : vector<16x128xf32> to vector<2x128xf32>
    %cst_53 = arith.constant dense<0.000000e+00> : vector<2x128xf32>
    %307 = tpu.matmul %286, %31, %cst_53 {dimension_numbers = #tpu.dot_dimension_numbers<[1], [0], [0], [1], [0, 0, 1, 1], [], []>} : vector<2x32xf32>, vector<32x128xf32>, vector<2x128xf32> -> vector<2x128xf32>
    %308 = arith.addf %306, %307 : vector<2x128xf32>
    %309 = vector.extract_strided_slice %308 {offsets = [0, 0], sizes = [2, 96], strides = [1, 1]} : vector<2x128xf32> to vector<2x96xf32>
    %310 = arith.negf %309 : vector<2x96xf32>
    %311 = math.exp %310 : vector<2x96xf32>
    %cst_54 = arith.constant 1.000000e+00 : f32
    %312 = vector.broadcast %cst_54 : f32 to vector<2x96xf32>
    %313 = arith.addf %312, %311 : vector<2x96xf32>
    %314 = arith.divf %312, %313 : vector<2x96xf32>
    %315 = vector.extract_strided_slice %314 {offsets = [0, 0], sizes = [2, 32], strides = [1, 1]} : vector<2x96xf32> to vector<2x32xf32>
    %316 = vector.extract_strided_slice %314 {offsets = [0, 32], sizes = [2, 32], strides = [1, 1]} : vector<2x96xf32> to vector<2x32xf32>
    %317 = vector.extract_strided_slice %314 {offsets = [0, 64], sizes = [2, 32], strides = [1, 1]} : vector<2x96xf32> to vector<2x32xf32>
    %318 = vector.extract_strided_slice %308 {offsets = [0, 96], sizes = [2, 32], strides = [1, 1]} : vector<2x128xf32> to vector<2x32xf32>
    %319 = math.tanh %318 : vector<2x32xf32>
    %320 = arith.mulf %316, %284 : vector<2x32xf32>
    %321 = arith.mulf %315, %319 : vector<2x32xf32>
    %322 = arith.addf %320, %321 : vector<2x32xf32>
    %323 = math.tanh %322 : vector<2x32xf32>
    %324 = arith.mulf %317, %323 : vector<2x32xf32>
    %325 = tpu.concatenate %324, %305 in 1 : vector<2x32xf32>, vector<2x64xf32> -> vector<2x96xf32>
    %cst_55 = arith.constant dense<0.000000e+00> : vector<2x256xf32>
    %326 = tpu.matmul %325, %32, %cst_55 {dimension_numbers = #tpu.dot_dimension_numbers<[1], [0], [0], [1], [0, 0, 1, 1], [], []>} : vector<2x96xf32>, vector<96x256xf32>, vector<2x256xf32> -> vector<2x256xf32>
    %327 = arith.addf %326, %35 : vector<2x256xf32>
    %328 = vector.extract_strided_slice %327 {offsets = [0, 0], sizes = [2, 192], strides = [1, 1]} : vector<2x256xf32> to vector<2x192xf32>
    %329 = arith.negf %328 : vector<2x192xf32>
    %330 = math.exp %329 : vector<2x192xf32>
    %cst_56 = arith.constant 1.000000e+00 : f32
    %331 = vector.broadcast %cst_56 : f32 to vector<2x192xf32>
    %332 = arith.addf %331, %330 : vector<2x192xf32>
    %333 = arith.divf %331, %332 : vector<2x192xf32>
    %334 = vector.extract_strided_slice %333 {offsets = [0, 0], sizes = [2, 64], strides = [1, 1]} : vector<2x192xf32> to vector<2x64xf32>
    %335 = vector.extract_strided_slice %333 {offsets = [0, 64], sizes = [2, 64], strides = [1, 1]} : vector<2x192xf32> to vector<2x64xf32>
    %336 = vector.extract_strided_slice %333 {offsets = [0, 128], sizes = [2, 64], strides = [1, 1]} : vector<2x192xf32> to vector<2x64xf32>
    %337 = vector.extract_strided_slice %327 {offsets = [0, 192], sizes = [2, 64], strides = [1, 1]} : vector<2x256xf32> to vector<2x64xf32>
    %338 = math.tanh %337 : vector<2x64xf32>
    %339 = arith.mulf %335, %303 : vector<2x64xf32>
    %340 = arith.mulf %334, %338 : vector<2x64xf32>
    %341 = arith.addf %339, %340 : vector<2x64xf32>
    %342 = math.tanh %341 : vector<2x64xf32>
    %343 = arith.mulf %336, %342 : vector<2x64xf32>
    %c0_57 = arith.constant 0 : index
    %c0_58 = arith.constant 0 : index
    %344 = vector.load %arg9[%c0_57, %c0_58] : memref<64x128xf32, #tpu.memory_space<vmem>>, vector<64x128xf32>
    %cst_59 = arith.constant dense<0.000000e+00> : vector<2x128xf32>
    %345 = tpu.matmul %343, %344, %cst_59 {dimension_numbers = #tpu.dot_dimension_numbers<[1], [0], [0], [1], [0, 0, 1, 1], [], []>} : vector<2x64xf32>, vector<64x128xf32>, vector<2x128xf32> -> vector<2x128xf32>
    %c0_60 = arith.constant 0 : index
    %c0_61 = arith.constant 0 : index
    %346 = vector.load %arg10[%c0_60, %c0_61] : memref<1x128xf32, #tpu.memory_space<vmem>>, vector<1x128xf32>
    %347 = vector.broadcast %346 : vector<1x128xf32> to vector<2x128xf32>
    %348 = arith.addf %345, %347 : vector<2x128xf32>
    %c0_62 = arith.constant 0 : index
    %c0_63 = arith.constant 0 : index
    %349 = vector.load %arg11[%c0_62, %c0_63] : memref<2x128xf32, #tpu.memory_space<vmem>>, vector<2x128xf32>
    tpu.vector_store %arg11[%c0_62, %c0_63], %348 {strides = array<i32>} : memref<2x128xf32, #tpu.memory_space<vmem>>, vector<2x128xf32>,
    return
  }
}

</mosaic_0001>

<llo_original>
// kernel: tpu_custom_call.1
$region0: #{tpu_custom_call.1}
  #allocation0 [shape = 'u32[]', space=smem, size = 0x4, offset = 0x4, fixed_abs, tag = 'smem constant byte address 0x4 - core index']
  #allocation1 [shape = 'u32[72,128]{1,0:T(1,128)}', space=vmem, size = 0x9000, scoped, tag = 'internal scratch']
  %s0 = inlined_call_operand.vmem [shape: f32[22,3], index: 0, kind: input, shape index: {}]
  %s1 = inlined_call_operand.vmem [shape: f32[22,3], index: 1, kind: input, shape index: {}]
  %s2 = inlined_call_operand.vmem [shape: f32[9,8], index: 2, kind: input, shape index: {}]
  %s3 = inlined_call_operand.vmem [shape: f32[24,16], index: 3, kind: input, shape index: {}]
  %s4 = inlined_call_operand.vmem [shape: f32[16,128], index: 4, kind: input, shape index: {}]
  %s5 = inlined_call_operand.vmem [shape: f32[32,128], index: 5, kind: input, shape index: {}]
  %s6 = inlined_call_operand.vmem [shape: f32[1,128], index: 6, kind: input, shape index: {}]
  %s7 = inlined_call_operand.hbm [shape: f32[96,256], index: 7, kind: input, shape index: {}]
  %s8 = inlined_call_operand.vmem [shape: f32[1,256], index: 8, kind: input, shape index: {}]
  %s9 = inlined_call_operand.hbm [shape: f32[64,128], index: 9, kind: input, shape index: {}]
  %s10 = inlined_call_operand.vmem [shape: f32[1,128], index: 10, kind: input, shape index: {}]
  %s11 = inlined_call_operand.hbm [shape: f32[2,128], index: 11, kind: output, shape index: {}]
  %s12 = sld [smem:[#allocation0]]
  $region62: #{tpu_custom_call.1} parent=0
    _
  %s14 = ssub.s32 1, %s12
  %s15 = scalar_select 0, %s14, %s12
  $region1: #{tpu_custom_call.1} parent=0
    #allocation2 [shape = 'u8[98304]{0}', space=vmem, size = 0x18000, scoped, tag = 'input window, operand 7, single buffered']
    #allocation3 [shape = 's32[1]{0}', space=sflag, size = 0x4, scoped, tag = 'scoped memory for tpu_custom_call.1']
    #allocation4 [shape = 's32[1]{0}', space=sflag, size = 0x4, scoped, tag = 'scoped memory for tpu_custom_call.1']
    #allocation5 [shape = 'u8[32768]{0}', space=vmem, size = 0x8000, scoped, tag = 'input window, operand 9, single buffered']
    #allocation6 [shape = 's32[1]{0}', space=sflag, size = 0x4, scoped, tag = 'scoped memory for tpu_custom_call.1']
    #allocation7 [shape = 'u8[1024]{0}', space=vmem, size = 0x400, scoped, tag = 'output window, operand 0, single buffered']
    %16 = vsyncpa [#allocation3], 0
    %17 = vsyncpa [#allocation6], 0
    %18 = vsyncpa [#allocation4], 0
    // Predicated region
    $region2: #{tpu_custom_call.1} parent=1 // pred_check
      _
    $region3: #{tpu_custom_call.1} parent=1 // pred_check_branch
      %20 = sbr.rel (0) target = $region5
    $region4: #{tpu_custom_call.1} parent=1 // pred_region
      _
    $region5: #{tpu_custom_call.1} parent=1 // pred_fallthru
      _
    // Predicated region
    $region6: #{tpu_custom_call.1} parent=1 // pred_check
      _
    $region7: #{tpu_custom_call.1} parent=1 // pred_check_branch
      %22 = sbr.rel (0) target = $region9
    $region8: #{tpu_custom_call.1} parent=1 // pred_region
      _
    $region9: #{tpu_custom_call.1} parent=1 // pred_fallthru
      _
    // Predicated region
    $region10: #{tpu_custom_call.1} parent=1 // pred_check
      _
    $region11: #{tpu_custom_call.1} parent=1 // pred_check_branch
      %24 = sbr.rel (0) target = $region13
    $region12: #{tpu_custom_call.1} parent=1 // pred_region
      _
    $region13: #{tpu_custom_call.1} parent=1 // pred_fallthru
      _
    // Predicated region
    $region14: #{tpu_custom_call.1} parent=1 // pred_check
      _
    $region15: #{tpu_custom_call.1} parent=1 // pred_check_branch
      %26 = sbr.rel (0) target = $region17
    $region16: #{tpu_custom_call.1} parent=1 // pred_region
      _
    $region17: #{tpu_custom_call.1} parent=1 // pred_fallthru
      _
    // Predicated region
    $region18: #{tpu_custom_call.1} parent=1 // pred_check
      _
    $region19: #{tpu_custom_call.1} parent=1 // pred_check_branch
      %28 = sbr.rel (0) target = $region21
    $region20: #{tpu_custom_call.1} parent=1 // pred_region
      _
    $region21: #{tpu_custom_call.1} parent=1 // pred_fallthru
      _
    // Predicated region
    $region22: #{tpu_custom_call.1} parent=1 // pred_check
      _
    $region23: #{tpu_custom_call.1} parent=1 // pred_check_branch
      %30 = sbr.rel (0) target = $region25
    $region24: #{tpu_custom_call.1} parent=1 // pred_region
      _
    $region25: #{tpu_custom_call.1} parent=1 // pred_fallthru
      _
    // Predicated region
    $region26: #{tpu_custom_call.1} parent=1 // pred_check
      _
    $region27: #{tpu_custom_call.1} parent=1 // pred_check_branch
      %32 = sbr.rel (0) target = $region29
    $region28: #{tpu_custom_call.1} parent=1 // pred_region
      _
    $region29: #{tpu_custom_call.1} parent=1 // pred_fallthru
      _
    // Predicated region
    $region30: #{tpu_custom_call.1} parent=1 // pred_check
      _
    $region31: #{tpu_custom_call.1} parent=1 // pred_check_branch
      %34 = sbr.rel (0) target = $region33
    $region32: #{tpu_custom_call.1} parent=1 // pred_region
      %36 = vsyncadd [#allocation3], 0
      %s37 = sshll.u32 %s7, 4
      %s38 = int_to_ptr.hbm [resolvable:$true] %s37
      %s39 = sshll.u32 [#allocation2], 4
      %s40 = int_to_ptr.vmem [resolvable:$true] %s39
      %45 = dma.hbm_to_vmem [thread:$0]  %s38, 3072, %s40, [#allocation3], 256, 256, 16
    $region33: #{tpu_custom_call.1} parent=1 // pred_fallthru
      _
    // Predicated region
    $region34: #{tpu_custom_call.1} parent=1 // pred_check
      _
    $region35: #{tpu_custom_call.1} parent=1 // pred_check_branch
      %47 = sbr.rel (0) target = $region37
    $region36: #{tpu_custom_call.1} parent=1 // pred_region
      _
    $region37: #{tpu_custom_call.1} parent=1 // pred_fallthru
      _
    // Predicated region
    $region38: #{tpu_custom_call.1} parent=1 // pred_check
      _
    $region39: #{tpu_custom_call.1} parent=1 // pred_check_branch
      %49 = sbr.rel (0) target = $region41
    $region40: #{tpu_custom_call.1} parent=1 // pred_region
      %51 = vsyncadd [#allocation6], 0
      %s52 = sshll.u32 %s9, 4
      %s53 = int_to_ptr.hbm [resolvable:$true] %s52
      %s54 = sshll.u32 [#allocation5], 4
      %s55 = int_to_ptr.vmem [resolvable:$true] %s54
      %60 = dma.hbm_to_vmem [thread:$0]  %s53, 1024, %s55, [#allocation6], 128, 128, 8
    $region41: #{tpu_custom_call.1} parent=1 // pred_fallthru
      _
    // Predicated region
    $region42: #{tpu_custom_call.1} parent=1 // pred_check
      _
    $region43: #{tpu_custom_call.1} parent=1 // pred_check_branch
      %62 = sbr.rel (0) target = $region45
    $region44: #{tpu_custom_call.1} parent=1 // pred_region
      _
    $region45: #{tpu_custom_call.1} parent=1 // pred_fallthru
      _
    // Predicated region
    $region46: #{tpu_custom_call.1} parent=1 // pred_check
      _
    $region47: #{tpu_custom_call.1} parent=1 // pred_check_branch
      %64 = sbr.rel (0) target = $region49
    $region48: #{tpu_custom_call.1} parent=1 // pred_region
      %66 = dma.done [#allocation3], 3072
    $region49: #{tpu_custom_call.1} parent=1 // pred_fallthru
      _
    // Predicated region
    $region50: #{tpu_custom_call.1} parent=1 // pred_check
      _
    $region51: #{tpu_custom_call.1} parent=1 // pred_check_branch
      %68 = sbr.rel (0) target = $region53
    $region52: #{tpu_custom_call.1} parent=1 // pred_region
      %70 = dma.done [#allocation6], 1024
    $region53: #{tpu_custom_call.1} parent=1 // pred_fallthru
      _
    %v71 = vld [vmem:[%s0] sm:$0xff]
    %v72 = vld [vmem:[%s0 + $0x8] sm:$0xff]
    %v73 = vld [vmem:[%s0 + $0x10] sm:$0x3f]
    %v74 = vld [vmem:[%s1] sm:$0xff]
    %v75 = vld [vmem:[%s1 + $0x8] sm:$0xff]
    %v76 = vld [vmem:[%s1 + $0x10] sm:$0x3f]
    %80 = vrot.lane.b32.xlu0 %v74, 3
    %v81 = vpop.permute.xlu0 %80
    %82 = vrot.lane.b32.xlu0 %v75, 3
    %v83 = vpop.permute.xlu0 %82
    %84 = vrot.lane.b32.xlu0 %v76, 3
    %v85 = vpop.permute.xlu0 %84
    %vm92 = vcmask 1045504
    %v93 = vrot.slane %v71, 2
    %v94 = vrot.slane %v72, 2
    %v95 = vsel %vm92, %v93, %v94
    %v96 = vrot.slane %v73, 2
    %v97 = vsel %vm92, %v94, %v96
    %98 = vrot.lane.b32.xlu0 %v95, 6
    %v99 = vpop.permute.xlu0 %98
    %100 = vrot.lane.b32.xlu0 %v97, 6
    %v101 = vpop.permute.xlu0 %100
    %102 = vrot.lane.b32.xlu0 %v96, 6
    %v103 = vpop.permute.xlu0 %102
    %vm107 = vcmask 23552
    %v108 = vsel %vm107, %v71, %v81
    %v109 = vsel %vm107, %v72, %v83
    %v110 = vsel %vm107, %v73, %v85
    %vm111 = vcmask 48128
    %v112 = vsel %vm111, %v108, %v99
    %v113 = vsel %vm111, %v109, %v101
    %v114 = vsel %vm111, %v110, %v103
    %115 = vrot.lane.b32.xlu0 %v95, 3
    %v116 = vpop.permute.xlu0 %115
    %117 = vrot.lane.b32.xlu0 %v97, 3
    %v118 = vpop.permute.xlu0 %117
    %119 = vrot.lane.b32.xlu0 %v96, 3
    %v120 = vpop.permute.xlu0 %119
    %v124 = vrot.slane %v74, 2
    %v125 = vrot.slane %v75, 2
    %v126 = vsel %vm92, %v124, %v125
    %v127 = vrot.slane %v76, 2
    %v128 = vsel %vm92, %v125, %v127
    %129 = vrot.lane.b32.xlu0 %v126, 6
    %v130 = vpop.permute.xlu0 %129
    %131 = vrot.lane.b32.xlu0 %v128, 6
    %v132 = vpop.permute.xlu0 %131
    %133 = vrot.lane.b32.xlu0 %v127, 6
    %v134 = vpop.permute.xlu0 %133
    %v138 = vsel %vm107, %v74, %v116
    %v139 = vsel %vm107, %v75, %v118
    %v140 = vsel %vm107, %v76, %v120
    %v141 = vsel %vm111, %v138, %v130
    %v142 = vsel %vm111, %v139, %v132
    %v143 = vsel %vm111, %v140, %v134
    %vm147 = vcmask 1043456
    %v148 = vrot.slane %v141, 4
    %v149 = vrot.slane %v142, 4
    %v150 = vsel %vm147, %v148, %v149
    %v151 = vrot.slane %v143, 4
    %v152 = vsel %vm147, %v149, %v151
    %v154 = vsel %vm147, %v114, %v148
    %v155 = vld [vmem:[%s2] sm:$0xff]
    %v156 = vld [vmem:[%s2 + $0x8] sm:$0x1]
    %vm157 = vcmask 72704
    %v159 = vsel %vm157, %v112, 0
    %v162 = vsel %vm157, %v113, 0
    %v165 = vsel %vm157, %v154, 0
    %v167 = vsel %vm157, %v150, 0
    %v169 = vsel %vm157, %v152, 0
    %vm171 = vcmask 1040384
    %v173 = vsel %vm171, %v156, 0
    %175 = vmatpush.msra.mxu0 0.0
    %176 = vmatpush.msra.mxu0 0.0
    %177 = vmatpush.msra.mxu0 0.0
    %178 = vmatpush.msra.mxu0 0.0
    %179 = vmatpush.msra.mxu0 0.0
    %180 = vmatpush.msra.mxu0 0.0
    %181 = vmatpush.msra.mxu0 0.0
    %182 = vmatpush.msra.mxu0 0.0
    %183 = vmatpush.msra.mxu0 0.0
    %184 = vmatpush.msra.mxu0 0.0
    %185 = vmatpush.msra.mxu0 0.0
    %186 = vmatpush.msra.mxu0 0.0
    %187 = vmatpush.msra.mxu0 0.0
    %188 = vmatpush.msra.mxu0 0.0
    %189 = vmatpush.msra.mxu0 %v173
    %190 = vmatpush.msra.mxu0 %v155
    %191 = vmatmul.f32.gmra.mxu0 %v159
    %v192 = vpop.f32.mrf.mxu0
    %v193 = vadd.f32 0.0, %v192
    %194 = vmatmul.f32.gmra.mxu0 %v162
    %v195 = vpop.f32.mrf.mxu0
    %v196 = vadd.f32 0.0, %v195
    %197 = vmatmul.f32.gmra.mxu0 %v165
    %v198 = vpop.f32.mrf.mxu0
    %v199 = vadd.f32 0.0, %v198
    %200 = vmatmul.f32.gmra.mxu0 %v167
    %v201 = vpop.f32.mrf.mxu0
    %v202 = vadd.f32 0.0, %v201
    %203 = vmatmul.f32.gmra.mxu0 %v169
    %v204 = vpop.f32.mrf.mxu0
    %v205 = vadd.f32 0.0, %v204
    %206 = vdwg.mxu0
    %v207 = vmax.f32 %v193, 0.0
    %v208 = vmax.f32 %v196, 0.0
    %v209 = vmax.f32 %v199, 0.0
    %v210 = vmax.f32 %v202, 0.0
    %v211 = vmax.f32 %v205, 0.0
    %v215 = vrot.slane %v209, 4
    %v216 = vrot.slane %v210, 4
    %v217 = vsel %vm147, %v215, %v216
    %v218 = vrot.slane %v211, 4
    %v219 = vsel %vm147, %v216, %v218
    %v223 = vmax.f32 %v207, %v217
    %v224 = vmax.f32 %v208, %v219
    %v225 = vmax.f32 %v209, %v218
    %v229 = vrot.slane %v223, 2
    %v230 = vrot.slane %v224, 2
    %v231 = vsel %vm92, %v229, %v230
    %v232 = vrot.slane %v225, 2
    %v233 = vsel %vm92, %v230, %v232
    %234 = vrot.lane.b32.xlu0 %v231, 8
    %v235 = vpop.permute.xlu0 %234
    %236 = vrot.lane.b32.xlu0 %v233, 8
    %v237 = vpop.permute.xlu0 %236
    %v240 = vrot.slane %v223, 4
    %v241 = vrot.slane %v224, 4
    %v242 = vsel %vm147, %v240, %v241
    %v243 = vrot.slane %v225, 4
    %v244 = vsel %vm147, %v241, %v243
    %245 = vrot.lane.b32.xlu0 %v242, 16
    %v246 = vpop.permute.xlu0 %245
    %247 = vrot.lane.b32.xlu0 %v244, 16
    %v248 = vpop.permute.xlu0 %247
    %vm251 = vcmask 64512
    %v252 = vsel %vm251, %v223, %v235
    %v253 = vsel %vm251, %v224, %v237
    %vm254 = vcmask 130048
    %v255 = vsel %vm254, %v252, %v246
    %v256 = vsel %vm254, %v253, %v248
    %v257 = vld [vmem:[%s3] sm:$0xff]
    %v258 = vld [vmem:[%s3 + $0x8] sm:$0xff]
    %v259 = vld [vmem:[%s3 + $0x10] sm:$0xff]
    %vm260 = vcmask 195584
    %v262 = vsel %vm260, %v255, 0
    %v265 = vsel %vm260, %v256, 0
    %267 = vmatpush.msra.mxu0 0.0
    %268 = vmatpush.msra.mxu0 0.0
    %269 = vmatpush.msra.mxu0 0.0
    %270 = vmatpush.msra.mxu0 0.0
    %271 = vmatpush.msra.mxu0 0.0
    %272 = vmatpush.msra.mxu0 0.0
    %273 = vmatpush.msra.mxu0 0.0
    %274 = vmatpush.msra.mxu0 0.0
    %275 = vmatpush.msra.mxu0 0.0
    %276 = vmatpush.msra.mxu0 0.0
    %277 = vmatpush.msra.mxu0 0.0
    %278 = vmatpush.msra.mxu0 0.0
    %279 = vmatpush.msra.mxu0 0.0
    %280 = vmatpush.msra.mxu0 %v259
    %281 = vmatpush.msra.mxu0 %v258
    %282 = vmatpush.msra.mxu0 %v257
    %283 = vmatmul.f32.gmra.mxu0 %v262
    %v284 = vpop.f32.mrf.mxu0
    %v285 = vadd.f32 0.0, %v284
    %286 = vmatmul.f32.gmra.mxu0 %v265
    %v287 = vpop.f32.mrf.mxu0
    %v288 = vadd.f32 0.0, %v287
    %289 = vdwg.mxu0
    %v290 = vmax.f32 %v285, 0.0
    %v291 = vmax.f32 %v288, 0.0
    %v292 = vld [vmem:[%s4] sm:$0xff]
    %v293 = vld [vmem:[%s4 + $0x8] sm:$0xff]
    %v294 = vld [vmem:[%s6] sm:$0x1]
    %v296 = vperm.slane %v294, 0
    %v299 = vsel %vm254, %v290, 0
    %v302 = vsel %vm254, %v291, 0
    %304 = vmatpush.msra.mxu0 0.0
    %305 = vmatpush.msra.mxu0 0.0
    %306 = vmatpush.msra.mxu0 0.0
    %307 = vmatpush.msra.mxu0 0.0
    %308 = vmatpush.msra.mxu0 0.0
    %309 = vmatpush.msra.mxu0 0.0
    %310 = vmatpush.msra.mxu0 0.0
    %311 = vmatpush.msra.mxu0 0.0
    %312 = vmatpush.msra.mxu0 0.0
    %313 = vmatpush.msra.mxu0 0.0
    %314 = vmatpush.msra.mxu0 0.0
    %315 = vmatpush.msra.mxu0 0.0
    %316 = vmatpush.msra.mxu0 0.0
    %317 = vmatpush.msra.mxu0 0.0
    %318 = vmatpush.msra.mxu0 %v293
    %319 = vmatpush.msra.mxu0 %v292
    %320 = vmatmul.f32.gmra.mxu0 %v299
    %v321 = vpop.f32.mrf.mxu0
    %v322 = vadd.f32 %v296, %v321
    %323 = vmatmul.f32.gmra.mxu0 %v302
    %v324 = vpop.f32.mrf.mxu0
    %v325 = vadd.f32 %v296, %v324
    %326 = vdwg.mxu0
    %v327 = vld [vmem:[%s5] sm:$0xff]
    %v328 = vld [vmem:[%s5 + $0x8] sm:$0xff]
    %v329 = vld [vmem:[%s5 + $0x10] sm:$0xff]
    %v330 = vld [vmem:[%s5 + $0x18] sm:$0xff]
    %v331 = vld [vmem:[#allocation2] sm:$0xff]
    %v332 = vld [vmem:[#allocation2 + $0x8] sm:$0xff]
    %v333 = vld [vmem:[#allocation2 + $0x10] sm:$0xff]
    %v334 = vld [vmem:[#allocation2 + $0x18] sm:$0xff]
    %v335 = vld [vmem:[#allocation2 + $0x20] sm:$0xff]
    %v336 = vld [vmem:[#allocation2 + $0x28] sm:$0xff]
    %v337 = vld [vmem:[#allocation2 + $0x30] sm:$0xff]
    %v338 = vld [vmem:[#allocation2 + $0x38] sm:$0xff]
    %v339 = vld [vmem:[#allocation2 + $0x40] sm:$0xff]
    %v340 = vld [vmem:[#allocation2 + $0x48] sm:$0xff]
    %v341 = vld [vmem:[#allocation2 + $0x50] sm:$0xff]
    %v342 = vld [vmem:[#allocation2 + $0x58] sm:$0xff]
    %v343 = vld [vmem:[#allocation2 + $0x60] sm:$0xff]
    %v344 = vld [vmem:[#allocation2 + $0x68] sm:$0xff]
    %v345 = vld [vmem:[#allocation2 + $0x70] sm:$0xff]
    %v346 = vld [vmem:[#allocation2 + $0x78] sm:$0xff]
    %v347 = vld [vmem:[#allocation2 + $0x80] sm:$0xff]
    %v348 = vld [vmem:[#allocation2 + $0x88] sm:$0xff]
    %v349 = vld [vmem:[#allocation2 + $0x90] sm:$0xff]
    %v350 = vld [vmem:[#allocation2 + $0x98] sm:$0xff]
    %v351 = vld [vmem:[#allocation2 + $0xa0] sm:$0xff]
    %v352 = vld [vmem:[#allocation2 + $0xa8] sm:$0xff]
    %v353 = vld [vmem:[#allocation2 + $0xb0] sm:$0xff]
    %v354 = vld [vmem:[#allocation2 + $0xb8] sm:$0xff]
    %v355 = vld [vmem:[%s8] sm:$0x3]
    %v357 = vperm.slane %v355, 0
    %v358 = vperm.slane %v355, 1
    %vm361 = vcmask 261120
    %v363 = vsel %vm361, 0.0, 0
    %365 = vmatpush.msra.mxu0 0.0
    %366 = vmatpush.msra.mxu0 0.0
    %367 = vmatpush.msra.mxu0 0.0
    %368 = vmatpush.msra.mxu0 0.0
    %369 = vmatpush.msra.mxu0 0.0
    %370 = vmatpush.msra.mxu0 0.0
    %371 = vmatpush.msra.mxu0 0.0
    %372 = vmatpush.msra.mxu0 0.0
    %373 = vmatpush.msra.mxu0 0.0
    %374 = vmatpush.msra.mxu0 0.0
    %375 = vmatpush.msra.mxu0 0.0
    %376 = vmatpush.msra.mxu0 0.0
    %377 = vmatpush.msra.mxu0 %v330
    %378 = vmatpush.msra.mxu0 %v329
    %379 = vmatpush.msra.mxu0 %v328
    %380 = vmatpush.msra.mxu0 %v327
    %381 = vmatmul.f32.gmra.mxu0 %v363
    %v382 = vpop.f32.mrf.mxu0
    %v383 = vadd.f32 0.0, %v382
    %384 = vdwg.mxu0
    %v385 = vadd.f32 %v322, %v383
    %v386 = vxor.u32 %v385, 2147483648
    %v387 = vmul.f32 %v386, 1.442695
    %v388 = vpow.pop %v387
    %v389 = vadd.f32 %v388, 1.0
    %v390 = vrcp.pop %v389
    %v391 = vmul.f32 %v389, %v390
    %v392 = vsub.f32 1.0, %v391
    %v393 = vmul.f32 %v390, %v392
    %v394 = vadd.f32 %v390, %v393
    %vm395 = vweird.f32 %v389
    %vm396 = vweird.f32 %v390
    %vm397 = vmor %vm395, %vm396
    %v398 = vsel %vm397, %v390, %v394
    %v399 = vand.u32 2147483647, %v389
    %vm400 = vcmp.eq.f32.partialorder %v399, 8.507059e+37
    %v401 = vand.u32 %v389, 2147483648
    %v402 = vor.u32 1.1754944e-38, %v401
    %v403 = vsel %vm400, %v402, %v398
    %v404 = vmul.f32 1.0, %v403
    %v405 = vtanh.pop %v385
    %v406 = vmul.f32 %v404, 0.0
    %408 = vrot.lane.b32.xlu0 %v405, 32
    %v409 = vpop.permute.xlu0 %408
    %v411 = vmul.f32 %v404, %v409
    %413 = vrot.lane.b32.xlu0 %v411, 32
    %v414 = vpop.permute.xlu0 %413
    %v416 = vadd.f32 %v406, %v414
    %v417 = vtanh.pop %v416
    %419 = vrot.lane.b32.xlu0 %v417, 32
    %v420 = vpop.permute.xlu0 %419
    %v422 = vmul.f32 %v404, %v420
    %424 = vrot.lane.b32.xlu0 %v422, 64
    %v425 = vpop.permute.xlu0 %424
    %v427 = vsel %vm361, %v425, 0.0
    %vm428 = vcmask 785408
    %v430 = vsel %vm428, %v427, 0
    %432 = vmatpush.msra.mxu0 0.0
    %433 = vmatpush.msra.mxu0 0.0
    %434 = vmatpush.msra.mxu0 0.0
    %435 = vmatpush.msra.mxu0 0.0
    %436 = vmatpush.msra.mxu0 %v353
    %437 = vmatpush.msra.mxu0 %v351
    %438 = vmatpush.msra.mxu0 %v349
    %439 = vmatpush.msra.mxu0 %v347
    %440 = vmatpush.msra.mxu0 %v345
    %441 = vmatpush.msra.mxu0 %v343
    %442 = vmatpush.msra.mxu0 %v341
    %443 = vmatpush.msra.mxu0 %v339
    %444 = vmatpush.msra.mxu0 %v337
    %445 = vmatpush.msra.mxu0 %v335
    %446 = vmatpush.msra.mxu0 %v333
    %447 = vmatpush.msra.mxu0 %v331
    %448 = vmatmul.f32.gmra.mxu0 %v430
    %v449 = vpop.f32.mrf.mxu0
    %v450 = vadd.f32 %v357, %v449
    %451 = vdwg.mxu0
    %452 = vmatpush.msra.mxu0 0.0
    %453 = vmatpush.msra.mxu0 0.0
    %454 = vmatpush.msra.mxu0 0.0
    %455 = vmatpush.msra.mxu0 0.0
    %456 = vmatpush.msra.mxu0 %v354
    %457 = vmatpush.msra.mxu0 %v352
    %458 = vmatpush.msra.mxu0 %v350
    %459 = vmatpush.msra.mxu0 %v348
    %460 = vmatpush.msra.mxu0 %v346
    %461 = vmatpush.msra.mxu0 %v344
    %462 = vmatpush.msra.mxu0 %v342
    %463 = vmatpush.msra.mxu0 %v340
    %464 = vmatpush.msra.mxu0 %v338
    %465 = vmatpush.msra.mxu0 %v336
    %466 = vmatpush.msra.mxu0 %v334
    %467 = vmatpush.msra.mxu0 %v332
    %468 = vmatmul.f32.gmra.mxu0 %v430
    %v469 = vpop.f32.mrf.mxu0
    %v470 = vadd.f32 %v358, %v469
    %471 = vdwg.mxu0
    %v472 = vxor.u32 %v450, 2147483648
    %v473 = vxor.u32 %v470, 2147483648
    %v474 = vmul.f32 %v472, 1.442695
    %v475 = vpow.pop %v474
    %v476 = vmul.f32 %v473, 1.442695
    %v477 = vpow.pop %v476
    %v478 = vadd.f32 %v475, 1.0
    %v479 = vadd.f32 %v477, 1.0
    %v480 = vrcp.pop %v478
    %v481 = vmul.f32 %v478, %v480
    %v482 = vsub.f32 1.0, %v481
    %v483 = vmul.f32 %v480, %v482
    %v484 = vadd.f32 %v480, %v483
    %vm485 = vweird.f32 %v478
    %vm486 = vweird.f32 %v480
    %vm487 = vmor %vm485, %vm486
    %v488 = vsel %vm487, %v480, %v484
    %v489 = vand.u32 2147483647, %v478
    %vm490 = vcmp.eq.f32.partialorder %v489, 8.507059e+37
    %v491 = vand.u32 %v478, 2147483648
    %v492 = vor.u32 1.1754944e-38, %v491
    %v493 = vsel %vm490, %v492, %v488
    %v494 = vmul.f32 1.0, %v493
    %v495 = vrcp.pop %v479
    %v496 = vmul.f32 %v479, %v495
    %v497 = vsub.f32 1.0, %v496
    %v498 = vmul.f32 %v495, %v497
    %v499 = vadd.f32 %v495, %v498
    %vm500 = vweird.f32 %v479
    %vm501 = vweird.f32 %v495
    %vm502 = vmor %vm500, %vm501
    %v503 = vsel %vm502, %v495, %v499
    %v504 = vand.u32 2147483647, %v479
    %vm505 = vcmp.eq.f32.partialorder %v504, 8.507059e+37
    %v506 = vand.u32 %v479, 2147483648
    %v507 = vor.u32 1.1754944e-38, %v506
    %v508 = vsel %vm505, %v507, %v503
    %v509 = vmul.f32 1.0, %v508
    %v510 = vtanh.pop %v470
    %v511 = vmul.f32 %v494, 0.0
    %513 = vrot.lane.b32.xlu0 %v510, 64
    %v514 = vpop.permute.xlu0 %513
    %v516 = vmul.f32 %v494, %v514
    %518 = vrot.lane.b32.xlu0 %v516, 64
    %v519 = vpop.permute.xlu0 %518
    %v521 = vadd.f32 %v511, %v519
    %v522 = vtanh.pop %v521
    %524 = vrot.lane.b32.xlu0 %v522, 64
    %v525 = vpop.permute.xlu0 %524
    %v527 = vmul.f32 %v509, %v525
    %v528 = vsel %vm361, %v425, 0
    %530 = vmatpush.msra.mxu0 0.0
    %531 = vmatpush.msra.mxu0 0.0
    %532 = vmatpush.msra.mxu0 0.0
    %533 = vmatpush.msra.mxu0 0.0
    %534 = vmatpush.msra.mxu0 0.0
    %535 = vmatpush.msra.mxu0 0.0
    %536 = vmatpush.msra.mxu0 0.0
    %537 = vmatpush.msra.mxu0 0.0
    %538 = vmatpush.msra.mxu0 0.0
    %539 = vmatpush.msra.mxu0 0.0
    %540 = vmatpush.msra.mxu0 0.0
    %541 = vmatpush.msra.mxu0 0.0
    %542 = vmatpush.msra.mxu0 %v330
    %543 = vmatpush.msra.mxu0 %v329
    %544 = vmatpush.msra.mxu0 %v328
    %545 = vmatpush.msra.mxu0 %v327
    %546 = vmatmul.f32.gmra.mxu0 %v528
    %v547 = vpop.f32.mrf.mxu0
    %v548 = vadd.f32 0.0, %v547
    %549 = vdwg.mxu0
    %v551 = vrot.slane %v548, 6
    %v553 = vadd.f32 %v322, %v551
    %v554 = vxor.u32 %v553, 2147483648
    %v555 = vmul.f32 %v554, 1.442695
    %v556 = vpow.pop %v555
    %v557 = vadd.f32 %v556, 1.0
    %v558 = vrcp.pop %v557
    %v559 = vmul.f32 %v557, %v558
    %v560 = vsub.f32 1.0, %v559
    %v561 = vmul.f32 %v558, %v560
    %v562 = vadd.f32 %v558, %v561
    %vm563 = vweird.f32 %v557
    %vm564 = vweird.f32 %v558
    %vm565 = vmor %vm563, %vm564
    %v566 = vsel %vm565, %v558, %v562
    %v567 = vand.u32 2147483647, %v557
    %vm568 = vcmp.eq.f32.partialorder %v567, 8.507059e+37
    %v569 = vand.u32 %v557, 2147483648
    %v570 = vor.u32 1.1754944e-38, %v569
    %v571 = vsel %vm568, %v570, %v566
    %v572 = vmul.f32 1.0, %v571
    %v573 = vtanh.pop %v553
    %v575 = vrot.slane %v416, 6
    %v577 = vmul.f32 %v572, %v575
    %579 = vrot.lane.b32.xlu0 %v573, 32
    %v580 = vpop.permute.xlu0 %579
    %v582 = vmul.f32 %v572, %v580
    %584 = vrot.lane.b32.xlu0 %v582, 32
    %v585 = vpop.permute.xlu0 %584
    %v587 = vadd.f32 %v577, %v585
    %v588 = vtanh.pop %v587
    %590 = vrot.lane.b32.xlu0 %v588, 32
    %v591 = vpop.permute.xlu0 %590
    %v593 = vmul.f32 %v572, %v591
    %595 = vrot.lane.b32.xlu0 %v593, 64
    %v596 = vpop.permute.xlu0 %595
    %v599 = vrot.slane %v527, 6
    %600 = vrot.lane.b32.xlu0 %v599, 32
    %v601 = vpop.permute.xlu0 %600
    %v603 = vsel %vm361, %v596, %v601
    %v605 = vrot.slane %v603, 2
    %v606 = vsel %vm428, %v605, 0
    %608 = vmatpush.msra.mxu0 0.0
    %609 = vmatpush.msra.mxu0 0.0
    %610 = vmatpush.msra.mxu0 0.0
    %611 = vmatpush.msra.mxu0 0.0
    %612 = vmatpush.msra.mxu0 %v353
    %613 = vmatpush.msra.mxu0 %v351
    %614 = vmatpush.msra.mxu0 %v349
    %615 = vmatpush.msra.mxu0 %v347
    %616 = vmatpush.msra.mxu0 %v345
    %617 = vmatpush.msra.mxu0 %v343
    %618 = vmatpush.msra.mxu0 %v341
    %619 = vmatpush.msra.mxu0 %v339
    %620 = vmatpush.msra.mxu0 %v337
    %621 = vmatpush.msra.mxu0 %v335
    %622 = vmatpush.msra.mxu0 %v333
    %623 = vmatpush.msra.mxu0 %v331
    %624 = vmatmul.f32.gmra.mxu0 %v606
    %v625 = vpop.f32.mrf.mxu0
    %v626 = vadd.f32 %v357, %v625
    %627 = vdwg.mxu0
    %628 = vmatpush.msra.mxu0 0.0
    %629 = vmatpush.msra.mxu0 0.0
    %630 = vmatpush.msra.mxu0 0.0
    %631 = vmatpush.msra.mxu0 0.0
    %632 = vmatpush.msra.mxu0 %v354
    %633 = vmatpush.msra.mxu0 %v352
    %634 = vmatpush.msra.mxu0 %v350
    %635 = vmatpush.msra.mxu0 %v348
    %636 = vmatpush.msra.mxu0 %v346
    %637 = vmatpush.msra.mxu0 %v344
    %638 = vmatpush.msra.mxu0 %v342
    %639 = vmatpush.msra.mxu0 %v340
    %640 = vmatpush.msra.mxu0 %v338
    %641 = vmatpush.msra.mxu0 %v336
    %642 = vmatpush.msra.mxu0 %v334
    %643 = vmatpush.msra.mxu0 %v332
    %644 = vmatmul.f32.gmra.mxu0 %v606
    %v645 = vpop.f32.mrf.mxu0
    %v646 = vadd.f32 %v358, %v645
    %647 = vdwg.mxu0
    %v648 = vxor.u32 %v626, 2147483648
    %v649 = vxor.u32 %v646, 2147483648
    %v650 = vmul.f32 %v648, 1.442695
    %v651 = vpow.pop %v650
    %v652 = vmul.f32 %v649, 1.442695
    %v653 = vpow.pop %v652
    %v654 = vadd.f32 %v651, 1.0
    %v655 = vadd.f32 %v653, 1.0
    %v656 = vrcp.pop %v654
    %v657 = vmul.f32 %v654, %v656
    %v658 = vsub.f32 1.0, %v657
    %v659 = vmul.f32 %v656, %v658
    %v660 = vadd.f32 %v656, %v659
    %vm661 = vweird.f32 %v654
    %vm662 = vweird.f32 %v656
    %vm663 = vmor %vm661, %vm662
    %v664 = vsel %vm663, %v656, %v660
    %v665 = vand.u32 2147483647, %v654
    %vm666 = vcmp.eq.f32.partialorder %v665, 8.507059e+37
    %v667 = vand.u32 %v654, 2147483648
    %v668 = vor.u32 1.1754944e-38, %v667
    %v669 = vsel %vm666, %v668, %v664
    %v670 = vmul.f32 1.0, %v669
    %v671 = vrcp.pop %v655
    %v672 = vmul.f32 %v655, %v671
    %v673 = vsub.f32 1.0, %v672
    %v674 = vmul.f32 %v671, %v673
    %v675 = vadd.f32 %v671, %v674
    %vm676 = vweird.f32 %v655
    %vm677 = vweird.f32 %v671
    %vm678 = vmor %vm676, %vm677
    %v679 = vsel %vm678, %v671, %v675
    %v680 = vand.u32 2147483647, %v655
    %vm681 = vcmp.eq.f32.partialorder %v680, 8.507059e+37
    %v682 = vand.u32 %v655, 2147483648
    %v683 = vor.u32 1.1754944e-38, %v682
    %v684 = vsel %vm681, %v683, %v679
    %v685 = vmul.f32 1.0, %v684
    %v686 = vtanh.pop %v646
    %v687 = vmul.f32 %v670, %v521
    %689 = vrot.lane.b32.xlu0 %v686, 64
    %v690 = vpop.permute.xlu0 %689
    %v692 = vmul.f32 %v670, %v690
    %694 = vrot.lane.b32.xlu0 %v692, 64
    %v695 = vpop.permute.xlu0 %694
    %v697 = vadd.f32 %v687, %v695
    %v698 = vtanh.pop %v697
    %700 = vrot.lane.b32.xlu0 %v698, 64
    %v701 = vpop.permute.xlu0 %700
    %v703 = vmul.f32 %v685, %v701
    %v704 = vrot.slane %v593, 2
    %705 = vrot.lane.b32.xlu0 %v704, 64
    %v706 = vpop.permute.xlu0 %705
    %v707 = vsel %vm361, %v706, 0
    %709 = vmatpush.msra.mxu0 0.0
    %710 = vmatpush.msra.mxu0 0.0
    %711 = vmatpush.msra.mxu0 0.0
    %712 = vmatpush.msra.mxu0 0.0
    %713 = vmatpush.msra.mxu0 0.0
    %714 = vmatpush.msra.mxu0 0.0
    %715 = vmatpush.msra.mxu0 0.0
    %716 = vmatpush.msra.mxu0 0.0
    %717 = vmatpush.msra.mxu0 0.0
    %718 = vmatpush.msra.mxu0 0.0
    %719 = vmatpush.msra.mxu0 0.0
    %720 = vmatpush.msra.mxu0 0.0
    %721 = vmatpush.msra.mxu0 %v330
    %722 = vmatpush.msra.mxu0 %v329
    %723 = vmatpush.msra.mxu0 %v328
    %724 = vmatpush.msra.mxu0 %v327
    %725 = vmatmul.f32.gmra.mxu0 %v707
    %v726 = vpop.f32.mrf.mxu0
    %v727 = vadd.f32 0.0, %v726
    %728 = vdwg.mxu0
    %v730 = vrot.slane %v727, 4
    %v732 = vadd.f32 %v322, %v730
    %v733 = vxor.u32 %v732, 2147483648
    %v734 = vmul.f32 %v733, 1.442695
    %v735 = vpow.pop %v734
    %v736 = vadd.f32 %v735, 1.0
    %v737 = vrcp.pop %v736
    %v738 = vmul.f32 %v736, %v737
    %v739 = vsub.f32 1.0, %v738
    %v740 = vmul.f32 %v737, %v739
    %v741 = vadd.f32 %v737, %v740
    %vm742 = vweird.f32 %v736
    %vm743 = vweird.f32 %v737
    %vm744 = vmor %vm742, %vm743
    %v745 = vsel %vm744, %v737, %v741
    %v746 = vand.u32 2147483647, %v736
    %vm747 = vcmp.eq.f32.partialorder %v746, 8.507059e+37
    %v748 = vand.u32 %v736, 2147483648
    %v749 = vor.u32 1.1754944e-38, %v748
    %v750 = vsel %vm747, %v749, %v745
    %v751 = vmul.f32 1.0, %v750
    %v752 = vtanh.pop %v732
    %v754 = vrot.slane %v587, 6
    %v756 = vmul.f32 %v751, %v754
    %758 = vrot.lane.b32.xlu0 %v752, 32
    %v759 = vpop.permute.xlu0 %758
    %v761 = vmul.f32 %v751, %v759
    %763 = vrot.lane.b32.xlu0 %v761, 32
    %v764 = vpop.permute.xlu0 %763
    %v766 = vadd.f32 %v756, %v764
    %v767 = vtanh.pop %v766
    %769 = vrot.lane.b32.xlu0 %v767, 32
    %v770 = vpop.permute.xlu0 %769
    %v772 = vmul.f32 %v751, %v770
    %774 = vrot.lane.b32.xlu0 %v772, 64
    %v775 = vpop.permute.xlu0 %774
    %v778 = vrot.slane %v703, 4
    %779 = vrot.lane.b32.xlu0 %v778, 32
    %v780 = vpop.permute.xlu0 %779
    %v782 = vsel %vm361, %v775, %v780
    %v784 = vrot.slane %v782, 4
    %v785 = vsel %vm428, %v784, 0
    %787 = vmatpush.msra.mxu0 0.0
    %788 = vmatpush.msra.mxu0 0.0
    %789 = vmatpush.msra.mxu0 0.0
    %790 = vmatpush.msra.mxu0 0.0
    %791 = vmatpush.msra.mxu0 %v353
    %792 = vmatpush.msra.mxu0 %v351
    %793 = vmatpush.msra.mxu0 %v349
    %794 = vmatpush.msra.mxu0 %v347
    %795 = vmatpush.msra.mxu0 %v345
    %796 = vmatpush.msra.mxu0 %v343
    %797 = vmatpush.msra.mxu0 %v341
    %798 = vmatpush.msra.mxu0 %v339
    %799 = vmatpush.msra.mxu0 %v337
    %800 = vmatpush.msra.mxu0 %v335
    %801 = vmatpush.msra.mxu0 %v333
    %802 = vmatpush.msra.mxu0 %v331
    %803 = vmatmul.f32.gmra.mxu0 %v785
    %v804 = vpop.f32.mrf.mxu0
    %v805 = vadd.f32 %v357, %v804
    %806 = vdwg.mxu0
    %807 = vmatpush.msra.mxu0 0.0
    %808 = vmatpush.msra.mxu0 0.0
    %809 = vmatpush.msra.mxu0 0.0
    %810 = vmatpush.msra.mxu0 0.0
    %811 = vmatpush.msra.mxu0 %v354
    %812 = vmatpush.msra.mxu0 %v352
    %813 = vmatpush.msra.mxu0 %v350
    %814 = vmatpush.msra.mxu0 %v348
    %815 = vmatpush.msra.mxu0 %v346
    %816 = vmatpush.msra.mxu0 %v344
    %817 = vmatpush.msra.mxu0 %v342
    %818 = vmatpush.msra.mxu0 %v340
    %819 = vmatpush.msra.mxu0 %v338
    %820 = vmatpush.msra.mxu0 %v336
    %821 = vmatpush.msra.mxu0 %v334
    %822 = vmatpush.msra.mxu0 %v332
    %823 = vmatmul.f32.gmra.mxu0 %v785
    %v824 = vpop.f32.mrf.mxu0
    %v825 = vadd.f32 %v358, %v824
    %826 = vdwg.mxu0
    %v827 = vxor.u32 %v805, 2147483648
    %v828 = vxor.u32 %v825, 2147483648
    %v829 = vmul.f32 %v827, 1.442695
    %v830 = vpow.pop %v829
    %v831 = vmul.f32 %v828, 1.442695
    %v832 = vpow.pop %v831
    %v833 = vadd.f32 %v830, 1.0
    %v834 = vadd.f32 %v832, 1.0
    %v835 = vrcp.pop %v833
    %v836 = vmul.f32 %v833, %v835
    %v837 = vsub.f32 1.0, %v836
    %v838 = vmul.f32 %v835, %v837
    %v839 = vadd.f32 %v835, %v838
    %vm840 = vweird.f32 %v833
    %vm841 = vweird.f32 %v835
    %vm842 = vmor %vm840, %vm841
    %v843 = vsel %vm842, %v835, %v839
    %v844 = vand.u32 2147483647, %v833
    %vm845 = vcmp.eq.f32.partialorder %v844, 8.507059e+37
    %v846 = vand.u32 %v833, 2147483648
    %v847 = vor.u32 1.1754944e-38, %v846
    %v848 = vsel %vm845, %v847, %v843
    %v849 = vmul.f32 1.0, %v848
    %v850 = vrcp.pop %v834
    %v851 = vmul.f32 %v834, %v850
    %v852 = vsub.f32 1.0, %v851
    %v853 = vmul.f32 %v850, %v852
    %v854 = vadd.f32 %v850, %v853
    %vm855 = vweird.f32 %v834
    %vm856 = vweird.f32 %v850
    %vm857 = vmor %vm855, %vm856
    %v858 = vsel %vm857, %v850, %v854
    %v859 = vand.u32 2147483647, %v834
    %vm860 = vcmp.eq.f32.partialorder %v859, 8.507059e+37
    %v861 = vand.u32 %v834, 2147483648
    %v862 = vor.u32 1.1754944e-38, %v861
    %v863 = vsel %vm860, %v862, %v858
    %v864 = vmul.f32 1.0, %v863
    %v865 = vtanh.pop %v825
    %v866 = vmul.f32 %v849, %v697
    %868 = vrot.lane.b32.xlu0 %v865, 64
    %v869 = vpop.permute.xlu0 %868
    %v871 = vmul.f32 %v849, %v869
    %873 = vrot.lane.b32.xlu0 %v871, 64
    %v874 = vpop.permute.xlu0 %873
    %v876 = vadd.f32 %v866, %v874
    %v877 = vtanh.pop %v876
    %879 = vrot.lane.b32.xlu0 %v877, 64
    %v880 = vpop.permute.xlu0 %879
    %v882 = vmul.f32 %v864, %v880
    %v883 = vrot.slane %v772, 4
    %884 = vrot.lane.b32.xlu0 %v883, 64
    %v885 = vpop.permute.xlu0 %884
    %v886 = vsel %vm361, %v885, 0
    %888 = vmatpush.msra.mxu0 0.0
    %889 = vmatpush.msra.mxu0 0.0
    %890 = vmatpush.msra.mxu0 0.0
    %891 = vmatpush.msra.mxu0 0.0
    %892 = vmatpush.msra.mxu0 0.0
    %893 = vmatpush.msra.mxu0 0.0
    %894 = vmatpush.msra.mxu0 0.0
    %895 = vmatpush.msra.mxu0 0.0
    %896 = vmatpush.msra.mxu0 0.0
    %897 = vmatpush.msra.mxu0 0.0
    %898 = vmatpush.msra.mxu0 0.0
    %899 = vmatpush.msra.mxu0 0.0
    %900 = vmatpush.msra.mxu0 %v330
    %901 = vmatpush.msra.mxu0 %v329
    %902 = vmatpush.msra.mxu0 %v328
    %903 = vmatpush.msra.mxu0 %v327
    %904 = vmatmul.f32.gmra.mxu0 %v886
    %v905 = vpop.f32.mrf.mxu0
    %v906 = vadd.f32 0.0, %v905
    %907 = vdwg.mxu0
    %v909 = vrot.slane %v906, 2
    %v911 = vadd.f32 %v322, %v909
    %v912 = vxor.u32 %v911, 2147483648
    %v913 = vmul.f32 %v912, 1.442695
    %v914 = vpow.pop %v913
    %v915 = vadd.f32 %v914, 1.0
    %v916 = vrcp.pop %v915
    %v917 = vmul.f32 %v915, %v916
    %v918 = vsub.f32 1.0, %v917
    %v919 = vmul.f32 %v916, %v918
    %v920 = vadd.f32 %v916, %v919
    %vm921 = vweird.f32 %v915
    %vm922 = vweird.f32 %v916
    %vm923 = vmor %vm921, %vm922
    %v924 = vsel %vm923, %v916, %v920
    %v925 = vand.u32 2147483647, %v915
    %vm926 = vcmp.eq.f32.partialorder %v925, 8.507059e+37
    %v927 = vand.u32 %v915, 2147483648
    %v928 = vor.u32 1.1754944e-38, %v927
    %v929 = vsel %vm926, %v928, %v924
    %v930 = vmul.f32 1.0, %v929
    %v931 = vtanh.pop %v911
    %v933 = vrot.slane %v766, 6
    %v935 = vmul.f32 %v930, %v933
    %937 = vrot.lane.b32.xlu0 %v931, 32
    %v938 = vpop.permute.xlu0 %937
    %v940 = vmul.f32 %v930, %v938
    %942 = vrot.lane.b32.xlu0 %v940, 32
    %v943 = vpop.permute.xlu0 %942
    %v945 = vadd.f32 %v935, %v943
    %v946 = vtanh.pop %v945
    %948 = vrot.lane.b32.xlu0 %v946, 32
    %v949 = vpop.permute.xlu0 %948
    %v951 = vmul.f32 %v930, %v949
    %953 = vrot.lane.b32.xlu0 %v951, 64
    %v954 = vpop.permute.xlu0 %953
    %v957 = vrot.slane %v882, 2
    %958 = vrot.lane.b32.xlu0 %v957, 32
    %v959 = vpop.permute.xlu0 %958
    %v961 = vsel %vm361, %v954, %v959
    %v963 = vrot.slane %v961, 6
    %v964 = vsel %vm428, %v963, 0
    %966 = vmatpush.msra.mxu0 0.0
    %967 = vmatpush.msra.mxu0 0.0
    %968 = vmatpush.msra.mxu0 0.0
    %969 = vmatpush.msra.mxu0 0.0
    %970 = vmatpush.msra.mxu0 %v353
    %971 = vmatpush.msra.mxu0 %v351
    %972 = vmatpush.msra.mxu0 %v349
    %973 = vmatpush.msra.mxu0 %v347
    %974 = vmatpush.msra.mxu0 %v345
    %975 = vmatpush.msra.mxu0 %v343
    %976 = vmatpush.msra.mxu0 %v341
    %977 = vmatpush.msra.mxu0 %v339
    %978 = vmatpush.msra.mxu0 %v337
    %979 = vmatpush.msra.mxu0 %v335
    %980 = vmatpush.msra.mxu0 %v333
    %981 = vmatpush.msra.mxu0 %v331
    %982 = vmatmul.f32.gmra.mxu0 %v964
    %v983 = vpop.f32.mrf.mxu0
    %v984 = vadd.f32 %v357, %v983
    %985 = vdwg.mxu0
    %986 = vmatpush.msra.mxu0 0.0
    %987 = vmatpush.msra.mxu0 0.0
    %988 = vmatpush.msra.mxu0 0.0
    %989 = vmatpush.msra.mxu0 0.0
    %990 = vmatpush.msra.mxu0 %v354
    %991 = vmatpush.msra.mxu0 %v352
    %992 = vmatpush.msra.mxu0 %v350
    %993 = vmatpush.msra.mxu0 %v348
    %994 = vmatpush.msra.mxu0 %v346
    %995 = vmatpush.msra.mxu0 %v344
    %996 = vmatpush.msra.mxu0 %v342
    %997 = vmatpush.msra.mxu0 %v340
    %998 = vmatpush.msra.mxu0 %v338
    %999 = vmatpush.msra.mxu0 %v336
    %1000 = vmatpush.msra.mxu0 %v334
    %1001 = vmatpush.msra.mxu0 %v332
    %1002 = vmatmul.f32.gmra.mxu0 %v964
    %v1003 = vpop.f32.mrf.mxu0
    %v1004 = vadd.f32 %v358, %v1003
    %1005 = vdwg.mxu0
    %v1006 = vxor.u32 %v984, 2147483648
    %v1007 = vxor.u32 %v1004, 2147483648
    %v1008 = vmul.f32 %v1006, 1.442695
    %v1009 = vpow.pop %v1008
    %v1010 = vmul.f32 %v1007, 1.442695
    %v1011 = vpow.pop %v1010
    %v1012 = vadd.f32 %v1009, 1.0
    %v1013 = vadd.f32 %v1011, 1.0
    %v1014 = vrcp.pop %v1012
    %v1015 = vmul.f32 %v1012, %v1014
    %v1016 = vsub.f32 1.0, %v1015
    %v1017 = vmul.f32 %v1014, %v1016
    %v1018 = vadd.f32 %v1014, %v1017
    %vm1019 = vweird.f32 %v1012
    %vm1020 = vweird.f32 %v1014
    %vm1021 = vmor %vm1019, %vm1020
    %v1022 = vsel %vm1021, %v1014, %v1018
    %v1023 = vand.u32 2147483647, %v1012
    %vm1024 = vcmp.eq.f32.partialorder %v1023, 8.507059e+37
    %v1025 = vand.u32 %v1012, 2147483648
    %v1026 = vor.u32 1.1754944e-38, %v1025
    %v1027 = vsel %vm1024, %v1026, %v1022
    %v1028 = vmul.f32 1.0, %v1027
    %v1029 = vrcp.pop %v1013
    %v1030 = vmul.f32 %v1013, %v1029
    %v1031 = vsub.f32 1.0, %v1030
    %v1032 = vmul.f32 %v1029, %v1031
    %v1033 = vadd.f32 %v1029, %v1032
    %vm1034 = vweird.f32 %v1013
    %vm1035 = vweird.f32 %v1029
    %vm1036 = vmor %vm1034, %vm1035
    %v1037 = vsel %vm1036, %v1029, %v1033
    %v1038 = vand.u32 2147483647, %v1013
    %vm1039 = vcmp.eq.f32.partialorder %v1038, 8.507059e+37
    %v1040 = vand.u32 %v1013, 2147483648
    %v1041 = vor.u32 1.1754944e-38, %v1040
    %v1042 = vsel %vm1039, %v1041, %v1037
    %v1043 = vmul.f32 1.0, %v1042
    %v1044 = vtanh.pop %v1004
    %v1045 = vmul.f32 %v1028, %v876
    %1047 = vrot.lane.b32.xlu0 %v1044, 64
    %v1048 = vpop.permute.xlu0 %1047
    %v1050 = vmul.f32 %v1028, %v1048
    %1052 = vrot.lane.b32.xlu0 %v1050, 64
    %v1053 = vpop.permute.xlu0 %1052
    %v1055 = vadd.f32 %v1045, %v1053
    %v1056 = vtanh.pop %v1055
    %1058 = vrot.lane.b32.xlu0 %v1056, 64
    %v1059 = vpop.permute.xlu0 %1058
    %v1061 = vmul.f32 %v1043, %v1059
    %v1062 = vrot.slane %v951, 6
    %1063 = vrot.lane.b32.xlu0 %v1062, 64
    %v1064 = vpop.permute.xlu0 %1063
    %v1065 = vsel %vm361, %v1064, 0
    %1067 = vmatpush.msra.mxu0 0.0
    %1068 = vmatpush.msra.mxu0 0.0
    %1069 = vmatpush.msra.mxu0 0.0
    %1070 = vmatpush.msra.mxu0 0.0
    %1071 = vmatpush.msra.mxu0 0.0
    %1072 = vmatpush.msra.mxu0 0.0
    %1073 = vmatpush.msra.mxu0 0.0
    %1074 = vmatpush.msra.mxu0 0.0
    %1075 = vmatpush.msra.mxu0 0.0
    %1076 = vmatpush.msra.mxu0 0.0
    %1077 = vmatpush.msra.mxu0 0.0
    %1078 = vmatpush.msra.mxu0 0.0
    %1079 = vmatpush.msra.mxu0 %v330
    %1080 = vmatpush.msra.mxu0 %v329
    %1081 = vmatpush.msra.mxu0 %v328
    %1082 = vmatpush.msra.mxu0 %v327
    %1083 = vmatmul.f32.gmra.mxu0 %v1065
    %v1084 = vpop.f32.mrf.mxu0
    %v1085 = vadd.f32 0.0, %v1084
    %1086 = vdwg.mxu0
    %v1087 = vadd.f32 %v325, %v1085
    %v1088 = vxor.u32 %v1087, 2147483648
    %v1089 = vmul.f32 %v1088, 1.442695
    %v1090 = vpow.pop %v1089
    %v1091 = vadd.f32 %v1090, 1.0
    %v1092 = vrcp.pop %v1091
    %v1093 = vmul.f32 %v1091, %v1092
    %v1094 = vsub.f32 1.0, %v1093
    %v1095 = vmul.f32 %v1092, %v1094
    %v1096 = vadd.f32 %v1092, %v1095
    %vm1097 = vweird.f32 %v1091
    %vm1098 = vweird.f32 %v1092
    %vm1099 = vmor %vm1097, %vm1098
    %v1100 = vsel %vm1099, %v1092, %v1096
    %v1101 = vand.u32 2147483647, %v1091
    %vm1102 = vcmp.eq.f32.partialorder %v1101, 8.507059e+37
    %v1103 = vand.u32 %v1091, 2147483648
    %v1104 = vor.u32 1.1754944e-38, %v1103
    %v1105 = vsel %vm1102, %v1104, %v1100
    %v1106 = vmul.f32 1.0, %v1105
    %v1107 = vtanh.pop %v1087
    %v1109 = vrot.slane %v945, 6
    %v1111 = vmul.f32 %v1106, %v1109
    %1113 = vrot.lane.b32.xlu0 %v1107, 32
    %v1114 = vpop.permute.xlu0 %1113
    %v1116 = vmul.f32 %v1106, %v1114
    %1118 = vrot.lane.b32.xlu0 %v1116, 32
    %v1119 = vpop.permute.xlu0 %1118
    %v1121 = vadd.f32 %v1111, %v1119
    %v1122 = vtanh.pop %v1121
    %1124 = vrot.lane.b32.xlu0 %v1122, 32
    %v1125 = vpop.permute.xlu0 %1124
    %v1127 = vmul.f32 %v1106, %v1125
    %1129 = vrot.lane.b32.xlu0 %v1127, 64
    %v1130 = vpop.permute.xlu0 %1129
    %1133 = vrot.lane.b32.xlu0 %v1061, 32
    %v1134 = vpop.permute.xlu0 %1133
    %v1136 = vsel %vm361, %v1130, %v1134
    %v1138 = vsel %vm428, %v1136, 0
    %1140 = vmatpush.msra.mxu0 0.0
    %1141 = vmatpush.msra.mxu0 0.0
    %1142 = vmatpush.msra.mxu0 0.0
    %1143 = vmatpush.msra.mxu0 0.0
    %1144 = vmatpush.msra.mxu0 %v353
    %1145 = vmatpush.msra.mxu0 %v351
    %1146 = vmatpush.msra.mxu0 %v349
    %1147 = vmatpush.msra.mxu0 %v347
    %1148 = vmatpush.msra.mxu0 %v345
    %1149 = vmatpush.msra.mxu0 %v343
    %1150 = vmatpush.msra.mxu0 %v341
    %1151 = vmatpush.msra.mxu0 %v339
    %1152 = vmatpush.msra.mxu0 %v337
    %1153 = vmatpush.msra.mxu0 %v335
    %1154 = vmatpush.msra.mxu0 %v333
    %1155 = vmatpush.msra.mxu0 %v331
    %1156 = vmatmul.f32.gmra.mxu0 %v1138
    %v1157 = vpop.f32.mrf.mxu0
    %v1158 = vadd.f32 %v357, %v1157
    %1159 = vdwg.mxu0
    %1160 = vmatpush.msra.mxu0 0.0
    %1161 = vmatpush.msra.mxu0 0.0
    %1162 = vmatpush.msra.mxu0 0.0
    %1163 = vmatpush.msra.mxu0 0.0
    %1164 = vmatpush.msra.mxu0 %v354
    %1165 = vmatpush.msra.mxu0 %v352
    %1166 = vmatpush.msra.mxu0 %v350
    %1167 = vmatpush.msra.mxu0 %v348
    %1168 = vmatpush.msra.mxu0 %v346
    %1169 = vmatpush.msra.mxu0 %v344
    %1170 = vmatpush.msra.mxu0 %v342
    %1171 = vmatpush.msra.mxu0 %v340
    %1172 = vmatpush.msra.mxu0 %v338
    %1173 = vmatpush.msra.mxu0 %v336
    %1174 = vmatpush.msra.mxu0 %v334
    %1175 = vmatpush.msra.mxu0 %v332
    %1176 = vmatmul.f32.gmra.mxu0 %v1138
    %v1177 = vpop.f32.mrf.mxu0
    %v1178 = vadd.f32 %v358, %v1177
    %1179 = vdwg.mxu0
    %v1180 = vxor.u32 %v1158, 2147483648
    %v1181 = vxor.u32 %v1178, 2147483648
    %v1182 = vmul.f32 %v1180, 1.442695
    %v1183 = vpow.pop %v1182
    %v1184 = vmul.f32 %v1181, 1.442695
    %v1185 = vpow.pop %v1184
    %v1186 = vadd.f32 %v1183, 1.0
    %v1187 = vadd.f32 %v1185, 1.0
    %v1188 = vrcp.pop %v1186
    %v1189 = vmul.f32 %v1186, %v1188
    %v1190 = vsub.f32 1.0, %v1189
    %v1191 = vmul.f32 %v1188, %v1190
    %v1192 = vadd.f32 %v1188, %v1191
    %vm1193 = vweird.f32 %v1186
    %vm1194 = vweird.f32 %v1188
    %vm1195 = vmor %vm1193, %vm1194
    %v1196 = vsel %vm1195, %v1188, %v1192
    %v1197 = vand.u32 2147483647, %v1186
    %vm1198 = vcmp.eq.f32.partialorder %v1197, 8.507059e+37
    %v1199 = vand.u32 %v1186, 2147483648
    %v1200 = vor.u32 1.1754944e-38, %v1199
    %v1201 = vsel %vm1198, %v1200, %v1196
    %v1202 = vmul.f32 1.0, %v1201
    %v1203 = vrcp.pop %v1187
    %v1204 = vmul.f32 %v1187, %v1203
    %v1205 = vsub.f32 1.0, %v1204
    %v1206 = vmul.f32 %v1203, %v1205
    %v1207 = vadd.f32 %v1203, %v1206
    %vm1208 = vweird.f32 %v1187
    %vm1209 = vweird.f32 %v1203
    %vm1210 = vmor %vm1208, %vm1209
    %v1211 = vsel %vm1210, %v1203, %v1207
    %v1212 = vand.u32 2147483647, %v1187
    %vm1213 = vcmp.eq.f32.partialorder %v1212, 8.507059e+37
    %v1214 = vand.u32 %v1187, 2147483648
    %v1215 = vor.u32 1.1754944e-38, %v1214
    %v1216 = vsel %vm1213, %v1215, %v1211
    %v1217 = vmul.f32 1.0, %v1216
    %v1218 = vtanh.pop %v1178
    %v1219 = vmul.f32 %v1202, %v1055
    %1221 = vrot.lane.b32.xlu0 %v1218, 64
    %v1222 = vpop.permute.xlu0 %1221
    %v1224 = vmul.f32 %v1202, %v1222
    %1226 = vrot.lane.b32.xlu0 %v1224, 64
    %v1227 = vpop.permute.xlu0 %1226
    %v1229 = vadd.f32 %v1219, %v1227
    %v1230 = vtanh.pop %v1229
    %1232 = vrot.lane.b32.xlu0 %v1230, 64
    %v1233 = vpop.permute.xlu0 %1232
    %v1235 = vmul.f32 %v1217, %v1233
    %v1236 = vsel %vm361, %v1130, 0
    %1238 = vmatpush.msra.mxu0 0.0
    %1239 = vmatpush.msra.mxu0 0.0
    %1240 = vmatpush.msra.mxu0 0.0
    %1241 = vmatpush.msra.mxu0 0.0
    %1242 = vmatpush.msra.mxu0 0.0
    %1243 = vmatpush.msra.mxu0 0.0
    %1244 = vmatpush.msra.mxu0 0.0
    %1245 = vmatpush.msra.mxu0 0.0
    %1246 = vmatpush.msra.mxu0 0.0
    %1247 = vmatpush.msra.mxu0 0.0
    %1248 = vmatpush.msra.mxu0 0.0
    %1249 = vmatpush.msra.mxu0 0.0
    %1250 = vmatpush.msra.mxu0 %v330
    %1251 = vmatpush.msra.mxu0 %v329
    %1252 = vmatpush.msra.mxu0 %v328
    %1253 = vmatpush.msra.mxu0 %v327
    %1254 = vmatmul.f32.gmra.mxu0 %v1236
    %v1255 = vpop.f32.mrf.mxu0
    %v1256 = vadd.f32 0.0, %v1255
    %1257 = vdwg.mxu0
    %v1259 = vrot.slane %v1256, 6
    %v1261 = vadd.f32 %v325, %v1259
    %v1262 = vxor.u32 %v1261, 2147483648
    %v1263 = vmul.f32 %v1262, 1.442695
    %v1264 = vpow.pop %v1263
    %v1265 = vadd.f32 %v1264, 1.0
    %v1266 = vrcp.pop %v1265
    %v1267 = vmul.f32 %v1265, %v1266
    %v1268 = vsub.f32 1.0, %v1267
    %v1269 = vmul.f32 %v1266, %v1268
    %v1270 = vadd.f32 %v1266, %v1269
    %vm1271 = vweird.f32 %v1265
    %vm1272 = vweird.f32 %v1266
    %vm1273 = vmor %vm1271, %vm1272
    %v1274 = vsel %vm1273, %v1266, %v1270
    %v1275 = vand.u32 2147483647, %v1265
    %vm1276 = vcmp.eq.f32.partialorder %v1275, 8.507059e+37
    %v1277 = vand.u32 %v1265, 2147483648
    %v1278 = vor.u32 1.1754944e-38, %v1277
    %v1279 = vsel %vm1276, %v1278, %v1274
    %v1280 = vmul.f32 1.0, %v1279
    %v1281 = vtanh.pop %v1261
    %v1283 = vrot.slane %v1121, 6
    %v1285 = vmul.f32 %v1280, %v1283
    %1287 = vrot.lane.b32.xlu0 %v1281, 32
    %v1288 = vpop.permute.xlu0 %1287
    %v1290 = vmul.f32 %v1280, %v1288
    %1292 = vrot.lane.b32.xlu0 %v1290, 32
    %v1293 = vpop.permute.xlu0 %1292
    %v1295 = vadd.f32 %v1285, %v1293
    %v1296 = vtanh.pop %v1295
    %1298 = vrot.lane.b32.xlu0 %v1296, 32
    %v1299 = vpop.permute.xlu0 %1298
    %v1301 = vmul.f32 %v1280, %v1299
    %1303 = vrot.lane.b32.xlu0 %v1301, 64
    %v1304 = vpop.permute.xlu0 %1303
    %v1307 = vrot.slane %v1235, 6
    %1308 = vrot.lane.b32.xlu0 %v1307, 32
    %v1309 = vpop.permute.xlu0 %1308
    %v1311 = vsel %vm361, %v1304, %v1309
    %v1313 = vrot.slane %v1311, 2
    %v1314 = vsel %vm428, %v1313, 0
    %1316 = vmatpush.msra.mxu0 0.0
    %1317 = vmatpush.msra.mxu0 0.0
    %1318 = vmatpush.msra.mxu0 0.0
    %1319 = vmatpush.msra.mxu0 0.0
    %1320 = vmatpush.msra.mxu0 %v353
    %1321 = vmatpush.msra.mxu0 %v351
    %1322 = vmatpush.msra.mxu0 %v349
    %1323 = vmatpush.msra.mxu0 %v347
    %1324 = vmatpush.msra.mxu0 %v345
    %1325 = vmatpush.msra.mxu0 %v343
    %1326 = vmatpush.msra.mxu0 %v341
    %1327 = vmatpush.msra.mxu0 %v339
    %1328 = vmatpush.msra.mxu0 %v337
    %1329 = vmatpush.msra.mxu0 %v335
    %1330 = vmatpush.msra.mxu0 %v333
    %1331 = vmatpush.msra.mxu0 %v331
    %1332 = vmatmul.f32.gmra.mxu0 %v1314
    %v1333 = vpop.f32.mrf.mxu0
    %v1334 = vadd.f32 %v357, %v1333
    %1335 = vdwg.mxu0
    %1336 = vmatpush.msra.mxu0 0.0
    %1337 = vmatpush.msra.mxu0 0.0
    %1338 = vmatpush.msra.mxu0 0.0
    %1339 = vmatpush.msra.mxu0 0.0
    %1340 = vmatpush.msra.mxu0 %v354
    %1341 = vmatpush.msra.mxu0 %v352
    %1342 = vmatpush.msra.mxu0 %v350
    %1343 = vmatpush.msra.mxu0 %v348
    %1344 = vmatpush.msra.mxu0 %v346
    %1345 = vmatpush.msra.mxu0 %v344
    %1346 = vmatpush.msra.mxu0 %v342
    %1347 = vmatpush.msra.mxu0 %v340
    %1348 = vmatpush.msra.mxu0 %v338
    %1349 = vmatpush.msra.mxu0 %v336
    %1350 = vmatpush.msra.mxu0 %v334
    %1351 = vmatpush.msra.mxu0 %v332
    %1352 = vmatmul.f32.gmra.mxu0 %v1314
    %v1353 = vpop.f32.mrf.mxu0
    %v1354 = vadd.f32 %v358, %v1353
    %1355 = vdwg.mxu0
    %v1356 = vxor.u32 %v1334, 2147483648
    %v1357 = vxor.u32 %v1354, 2147483648
    %v1358 = vmul.f32 %v1356, 1.442695
    %v1359 = vpow.pop %v1358
    %v1360 = vmul.f32 %v1357, 1.442695
    %v1361 = vpow.pop %v1360
    %v1362 = vadd.f32 %v1359, 1.0
    %v1363 = vadd.f32 %v1361, 1.0
    %v1364 = vrcp.pop %v1362
    %v1365 = vmul.f32 %v1362, %v1364
    %v1366 = vsub.f32 1.0, %v1365
    %v1367 = vmul.f32 %v1364, %v1366
    %v1368 = vadd.f32 %v1364, %v1367
    %vm1369 = vweird.f32 %v1362
    %vm1370 = vweird.f32 %v1364
    %vm1371 = vmor %vm1369, %vm1370
    %v1372 = vsel %vm1371, %v1364, %v1368
    %v1373 = vand.u32 2147483647, %v1362
    %vm1374 = vcmp.eq.f32.partialorder %v1373, 8.507059e+37
    %v1375 = vand.u32 %v1362, 2147483648
    %v1376 = vor.u32 1.1754944e-38, %v1375
    %v1377 = vsel %vm1374, %v1376, %v1372
    %v1378 = vmul.f32 1.0, %v1377
    %v1379 = vrcp.pop %v1363
    %v1380 = vmul.f32 %v1363, %v1379
    %v1381 = vsub.f32 1.0, %v1380
    %v1382 = vmul.f32 %v1379, %v1381
    %v1383 = vadd.f32 %v1379, %v1382
    %vm1384 = vweird.f32 %v1363
    %vm1385 = vweird.f32 %v1379
    %vm1386 = vmor %vm1384, %vm1385
    %v1387 = vsel %vm1386, %v1379, %v1383
    %v1388 = vand.u32 2147483647, %v1363
    %vm1389 = vcmp.eq.f32.partialorder %v1388, 8.507059e+37
    %v1390 = vand.u32 %v1363, 2147483648
    %v1391 = vor.u32 1.1754944e-38, %v1390
    %v1392 = vsel %vm1389, %v1391, %v1387
    %v1393 = vmul.f32 1.0, %v1392
    %v1394 = vtanh.pop %v1354
    %v1395 = vmul.f32 %v1378, %v1229
    %1397 = vrot.lane.b32.xlu0 %v1394, 64
    %v1398 = vpop.permute.xlu0 %1397
    %v1400 = vmul.f32 %v1378, %v1398
    %1402 = vrot.lane.b32.xlu0 %v1400, 64
    %v1403 = vpop.permute.xlu0 %1402
    %v1405 = vadd.f32 %v1395, %v1403
    %v1406 = vtanh.pop %v1405
    %1408 = vrot.lane.b32.xlu0 %v1406, 64
    %v1409 = vpop.permute.xlu0 %1408
    %v1411 = vmul.f32 %v1393, %v1409
    %v1412 = vrot.slane %v1301, 2
    %1413 = vrot.lane.b32.xlu0 %v1412, 64
    %v1414 = vpop.permute.xlu0 %1413
    %v1415 = vsel %vm361, %v1414, 0
    %1417 = vmatpush.msra.mxu0 0.0
    %1418 = vmatpush.msra.mxu0 0.0
    %1419 = vmatpush.msra.mxu0 0.0
    %1420 = vmatpush.msra.mxu0 0.0
    %1421 = vmatpush.msra.mxu0 0.0
    %1422 = vmatpush.msra.mxu0 0.0
    %1423 = vmatpush.msra.mxu0 0.0
    %1424 = vmatpush.msra.mxu0 0.0
    %1425 = vmatpush.msra.mxu0 0.0
    %1426 = vmatpush.msra.mxu0 0.0
    %1427 = vmatpush.msra.mxu0 0.0
    %1428 = vmatpush.msra.mxu0 0.0
    %1429 = vmatpush.msra.mxu0 %v330
    %1430 = vmatpush.msra.mxu0 %v329
    %1431 = vmatpush.msra.mxu0 %v328
    %1432 = vmatpush.msra.mxu0 %v327
    %1433 = vmatmul.f32.gmra.mxu0 %v1415
    %v1434 = vpop.f32.mrf.mxu0
    %v1435 = vadd.f32 0.0, %v1434
    %1436 = vdwg.mxu0
    %v1438 = vrot.slane %v1435, 4
    %v1440 = vadd.f32 %v325, %v1438
    %v1441 = vxor.u32 %v1440, 2147483648
    %v1442 = vmul.f32 %v1441, 1.442695
    %v1443 = vpow.pop %v1442
    %v1444 = vadd.f32 %v1443, 1.0
    %v1445 = vrcp.pop %v1444
    %v1446 = vmul.f32 %v1444, %v1445
    %v1447 = vsub.f32 1.0, %v1446
    %v1448 = vmul.f32 %v1445, %v1447
    %v1449 = vadd.f32 %v1445, %v1448
    %vm1450 = vweird.f32 %v1444
    %vm1451 = vweird.f32 %v1445
    %vm1452 = vmor %vm1450, %vm1451
    %v1453 = vsel %vm1452, %v1445, %v1449
    %v1454 = vand.u32 2147483647, %v1444
    %vm1455 = vcmp.eq.f32.partialorder %v1454, 8.507059e+37
    %v1456 = vand.u32 %v1444, 2147483648
    %v1457 = vor.u32 1.1754944e-38, %v1456
    %v1458 = vsel %vm1455, %v1457, %v1453
    %v1459 = vmul.f32 1.0, %v1458
    %v1460 = vtanh.pop %v1440
    %v1462 = vrot.slane %v1295, 6
    %v1464 = vmul.f32 %v1459, %v1462
    %1466 = vrot.lane.b32.xlu0 %v1460, 32
    %v1467 = vpop.permute.xlu0 %1466
    %v1469 = vmul.f32 %v1459, %v1467
    %1471 = vrot.lane.b32.xlu0 %v1469, 32
    %v1472 = vpop.permute.xlu0 %1471
    %v1474 = vadd.f32 %v1464, %v1472
    %v1475 = vtanh.pop %v1474
    %1477 = vrot.lane.b32.xlu0 %v1475, 32
    %v1478 = vpop.permute.xlu0 %1477
    %v1480 = vmul.f32 %v1459, %v1478
    %1482 = vrot.lane.b32.xlu0 %v1480, 64
    %v1483 = vpop.permute.xlu0 %1482
    %v1486 = vrot.slane %v1411, 4
    %1487 = vrot.lane.b32.xlu0 %v1486, 32
    %v1488 = vpop.permute.xlu0 %1487
    %v1490 = vsel %vm361, %v1483, %v1488
    %v1492 = vrot.slane %v1490, 4
    %v1493 = vsel %vm428, %v1492, 0
    %1495 = vmatpush.msra.mxu0 0.0
    %1496 = vmatpush.msra.mxu0 0.0
    %1497 = vmatpush.msra.mxu0 0.0
    %1498 = vmatpush.msra.mxu0 0.0
    %1499 = vmatpush.msra.mxu0 %v353
    %1500 = vmatpush.msra.mxu0 %v351
    %1501 = vmatpush.msra.mxu0 %v349
    %1502 = vmatpush.msra.mxu0 %v347
    %1503 = vmatpush.msra.mxu0 %v345
    %1504 = vmatpush.msra.mxu0 %v343
    %1505 = vmatpush.msra.mxu0 %v341
    %1506 = vmatpush.msra.mxu0 %v339
    %1507 = vmatpush.msra.mxu0 %v337
    %1508 = vmatpush.msra.mxu0 %v335
    %1509 = vmatpush.msra.mxu0 %v333
    %1510 = vmatpush.msra.mxu0 %v331
    %1511 = vmatmul.f32.gmra.mxu0 %v1493
    %v1512 = vpop.f32.mrf.mxu0
    %v1513 = vadd.f32 %v357, %v1512
    %1514 = vdwg.mxu0
    %1515 = vmatpush.msra.mxu0 0.0
    %1516 = vmatpush.msra.mxu0 0.0
    %1517 = vmatpush.msra.mxu0 0.0
    %1518 = vmatpush.msra.mxu0 0.0
    %1519 = vmatpush.msra.mxu0 %v354
    %1520 = vmatpush.msra.mxu0 %v352
    %1521 = vmatpush.msra.mxu0 %v350
    %1522 = vmatpush.msra.mxu0 %v348
    %1523 = vmatpush.msra.mxu0 %v346
    %1524 = vmatpush.msra.mxu0 %v344
    %1525 = vmatpush.msra.mxu0 %v342
    %1526 = vmatpush.msra.mxu0 %v340
    %1527 = vmatpush.msra.mxu0 %v338
    %1528 = vmatpush.msra.mxu0 %v336
    %1529 = vmatpush.msra.mxu0 %v334
    %1530 = vmatpush.msra.mxu0 %v332
    %1531 = vmatmul.f32.gmra.mxu0 %v1493
    %v1532 = vpop.f32.mrf.mxu0
    %v1533 = vadd.f32 %v358, %v1532
    %1534 = vdwg.mxu0
    %v1535 = vxor.u32 %v1513, 2147483648
    %v1536 = vxor.u32 %v1533, 2147483648
    %v1537 = vmul.f32 %v1535, 1.442695
    %v1538 = vpow.pop %v1537
    %v1539 = vmul.f32 %v1536, 1.442695
    %v1540 = vpow.pop %v1539
    %v1541 = vadd.f32 %v1538, 1.0
    %v1542 = vadd.f32 %v1540, 1.0
    %v1543 = vrcp.pop %v1541
    %v1544 = vmul.f32 %v1541, %v1543
    %v1545 = vsub.f32 1.0, %v1544
    %v1546 = vmul.f32 %v1543, %v1545
    %v1547 = vadd.f32 %v1543, %v1546
    %vm1548 = vweird.f32 %v1541
    %vm1549 = vweird.f32 %v1543
    %vm1550 = vmor %vm1548, %vm1549
    %v1551 = vsel %vm1550, %v1543, %v1547
    %v1552 = vand.u32 2147483647, %v1541
    %vm1553 = vcmp.eq.f32.partialorder %v1552, 8.507059e+37
    %v1554 = vand.u32 %v1541, 2147483648
    %v1555 = vor.u32 1.1754944e-38, %v1554
    %v1556 = vsel %vm1553, %v1555, %v1551
    %v1557 = vmul.f32 1.0, %v1556
    %v1558 = vrcp.pop %v1542
    %v1559 = vmul.f32 %v1542, %v1558
    %v1560 = vsub.f32 1.0, %v1559
    %v1561 = vmul.f32 %v1558, %v1560
    %v1562 = vadd.f32 %v1558, %v1561
    %vm1563 = vweird.f32 %v1542
    %vm1564 = vweird.f32 %v1558
    %vm1565 = vmor %vm1563, %vm1564
    %v1566 = vsel %vm1565, %v1558, %v1562
    %v1567 = vand.u32 2147483647, %v1542
    %vm1568 = vcmp.eq.f32.partialorder %v1567, 8.507059e+37
    %v1569 = vand.u32 %v1542, 2147483648
    %v1570 = vor.u32 1.1754944e-38, %v1569
    %v1571 = vsel %vm1568, %v1570, %v1566
    %v1572 = vmul.f32 1.0, %v1571
    %v1573 = vtanh.pop %v1533
    %v1574 = vmul.f32 %v1557, %v1405
    %1576 = vrot.lane.b32.xlu0 %v1573, 64
    %v1577 = vpop.permute.xlu0 %1576
    %v1579 = vmul.f32 %v1557, %v1577
    %1581 = vrot.lane.b32.xlu0 %v1579, 64
    %v1582 = vpop.permute.xlu0 %1581
    %v1584 = vadd.f32 %v1574, %v1582
    %v1585 = vtanh.pop %v1584
    %1587 = vrot.lane.b32.xlu0 %v1585, 64
    %v1588 = vpop.permute.xlu0 %1587
    %v1590 = vmul.f32 %v1572, %v1588
    %v1591 = vrot.slane %v1480, 4
    %1592 = vrot.lane.b32.xlu0 %v1591, 64
    %v1593 = vpop.permute.xlu0 %1592
    %v1594 = vsel %vm361, %v1593, 0
    %1596 = vmatpush.msra.mxu0 0.0
    %1597 = vmatpush.msra.mxu0 0.0
    %1598 = vmatpush.msra.mxu0 0.0
    %1599 = vmatpush.msra.mxu0 0.0
    %1600 = vmatpush.msra.mxu0 0.0
    %1601 = vmatpush.msra.mxu0 0.0
    %1602 = vmatpush.msra.mxu0 0.0
    %1603 = vmatpush.msra.mxu0 0.0
    %1604 = vmatpush.msra.mxu0 0.0
    %1605 = vmatpush.msra.mxu0 0.0
    %1606 = vmatpush.msra.mxu0 0.0
    %1607 = vmatpush.msra.mxu0 0.0
    %1608 = vmatpush.msra.mxu0 %v330
    %1609 = vmatpush.msra.mxu0 %v329
    %1610 = vmatpush.msra.mxu0 %v328
    %1611 = vmatpush.msra.mxu0 %v327
    %1612 = vmatmul.f32.gmra.mxu0 %v1594
    %v1613 = vpop.f32.mrf.mxu0
    %v1614 = vadd.f32 0.0, %v1613
    %1615 = vdwg.mxu0
    %v1617 = vrot.slane %v1614, 2
    %v1619 = vadd.f32 %v325, %v1617
    %v1620 = vxor.u32 %v1619, 2147483648
    %v1621 = vmul.f32 %v1620, 1.442695
    %v1622 = vpow.pop %v1621
    %v1623 = vadd.f32 %v1622, 1.0
    %v1624 = vrcp.pop %v1623
    %v1625 = vmul.f32 %v1623, %v1624
    %v1626 = vsub.f32 1.0, %v1625
    %v1627 = vmul.f32 %v1624, %v1626
    %v1628 = vadd.f32 %v1624, %v1627
    %vm1629 = vweird.f32 %v1623
    %vm1630 = vweird.f32 %v1624
    %vm1631 = vmor %vm1629, %vm1630
    %v1632 = vsel %vm1631, %v1624, %v1628
    %v1633 = vand.u32 2147483647, %v1623
    %vm1634 = vcmp.eq.f32.partialorder %v1633, 8.507059e+37
    %v1635 = vand.u32 %v1623, 2147483648
    %v1636 = vor.u32 1.1754944e-38, %v1635
    %v1637 = vsel %vm1634, %v1636, %v1632
    %v1638 = vmul.f32 1.0, %v1637
    %v1639 = vtanh.pop %v1619
    %v1641 = vrot.slane %v1474, 6
    %v1643 = vmul.f32 %v1638, %v1641
    %1645 = vrot.lane.b32.xlu0 %v1639, 32
    %v1646 = vpop.permute.xlu0 %1645
    %v1648 = vmul.f32 %v1638, %v1646
    %1650 = vrot.lane.b32.xlu0 %v1648, 32
    %v1651 = vpop.permute.xlu0 %1650
    %v1653 = vadd.f32 %v1643, %v1651
    %v1654 = vtanh.pop %v1653
    %1656 = vrot.lane.b32.xlu0 %v1654, 32
    %v1657 = vpop.permute.xlu0 %1656
    %v1659 = vmul.f32 %v1638, %v1657
    %1661 = vrot.lane.b32.xlu0 %v1659, 64
    %v1662 = vpop.permute.xlu0 %1661
    %v1665 = vrot.slane %v1590, 2
    %1666 = vrot.lane.b32.xlu0 %v1665, 32
    %v1667 = vpop.permute.xlu0 %1666
    %v1669 = vsel %vm361, %v1662, %v1667
    %v1671 = vrot.slane %v1669, 6
    %v1672 = vsel %vm428, %v1671, 0
    %1674 = vmatpush.msra.mxu0 0.0
    %1675 = vmatpush.msra.mxu0 0.0
    %1676 = vmatpush.msra.mxu0 0.0
    %1677 = vmatpush.msra.mxu0 0.0
    %1678 = vmatpush.msra.mxu0 %v353
    %1679 = vmatpush.msra.mxu0 %v351
    %1680 = vmatpush.msra.mxu0 %v349
    %1681 = vmatpush.msra.mxu0 %v347
    %1682 = vmatpush.msra.mxu0 %v345
    %1683 = vmatpush.msra.mxu0 %v343
    %1684 = vmatpush.msra.mxu0 %v341
    %1685 = vmatpush.msra.mxu0 %v339
    %1686 = vmatpush.msra.mxu0 %v337
    %1687 = vmatpush.msra.mxu0 %v335
    %1688 = vmatpush.msra.mxu0 %v333
    %1689 = vmatpush.msra.mxu0 %v331
    %1690 = vmatmul.f32.gmra.mxu0 %v1672
    %v1691 = vpop.f32.mrf.mxu0
    %v1692 = vadd.f32 %v357, %v1691
    %1693 = vdwg.mxu0
    %1694 = vmatpush.msra.mxu0 0.0
    %1695 = vmatpush.msra.mxu0 0.0
    %1696 = vmatpush.msra.mxu0 0.0
    %1697 = vmatpush.msra.mxu0 0.0
    %1698 = vmatpush.msra.mxu0 %v354
    %1699 = vmatpush.msra.mxu0 %v352
    %1700 = vmatpush.msra.mxu0 %v350
    %1701 = vmatpush.msra.mxu0 %v348
    %1702 = vmatpush.msra.mxu0 %v346
    %1703 = vmatpush.msra.mxu0 %v344
    %1704 = vmatpush.msra.mxu0 %v342
    %1705 = vmatpush.msra.mxu0 %v340
    %1706 = vmatpush.msra.mxu0 %v338
    %1707 = vmatpush.msra.mxu0 %v336
    %1708 = vmatpush.msra.mxu0 %v334
    %1709 = vmatpush.msra.mxu0 %v332
    %1710 = vmatmul.f32.gmra.mxu0 %v1672
    %v1711 = vpop.f32.mrf.mxu0
    %v1712 = vadd.f32 %v358, %v1711
    %1713 = vdwg.mxu0
    %v1714 = vxor.u32 %v1692, 2147483648
    %v1715 = vxor.u32 %v1712, 2147483648
    %v1716 = vmul.f32 %v1714, 1.442695
    %v1717 = vpow.pop %v1716
    %v1718 = vmul.f32 %v1715, 1.442695
    %v1719 = vpow.pop %v1718
    %v1720 = vadd.f32 %v1717, 1.0
    %v1721 = vadd.f32 %v1719, 1.0
    %v1722 = vrcp.pop %v1720
    %v1723 = vmul.f32 %v1720, %v1722
    %v1724 = vsub.f32 1.0, %v1723
    %v1725 = vmul.f32 %v1722, %v1724
    %v1726 = vadd.f32 %v1722, %v1725
    %vm1727 = vweird.f32 %v1720
    %vm1728 = vweird.f32 %v1722
    %vm1729 = vmor %vm1727, %vm1728
    %v1730 = vsel %vm1729, %v1722, %v1726
    %v1731 = vand.u32 2147483647, %v1720
    %vm1732 = vcmp.eq.f32.partialorder %v1731, 8.507059e+37
    %v1733 = vand.u32 %v1720, 2147483648
    %v1734 = vor.u32 1.1754944e-38, %v1733
    %v1735 = vsel %vm1732, %v1734, %v1730
    %v1736 = vmul.f32 1.0, %v1735
    %v1737 = vrcp.pop %v1721
    %v1738 = vmul.f32 %v1721, %v1737
    %v1739 = vsub.f32 1.0, %v1738
    %v1740 = vmul.f32 %v1737, %v1739
    %v1741 = vadd.f32 %v1737, %v1740
    %vm1742 = vweird.f32 %v1721
    %vm1743 = vweird.f32 %v1737
    %vm1744 = vmor %vm1742, %vm1743
    %v1745 = vsel %vm1744, %v1737, %v1741
    %v1746 = vand.u32 2147483647, %v1721
    %vm1747 = vcmp.eq.f32.partialorder %v1746, 8.507059e+37
    %v1748 = vand.u32 %v1721, 2147483648
    %v1749 = vor.u32 1.1754944e-38, %v1748
    %v1750 = vsel %vm1747, %v1749, %v1745
    %v1751 = vmul.f32 1.0, %v1750
    %v1752 = vtanh.pop %v1712
    %v1753 = vmul.f32 %v1736, %v1584
    %1755 = vrot.lane.b32.xlu0 %v1752, 64
    %v1756 = vpop.permute.xlu0 %1755
    %v1758 = vmul.f32 %v1736, %v1756
    %1760 = vrot.lane.b32.xlu0 %v1758, 64
    %v1761 = vpop.permute.xlu0 %1760
    %v1763 = vadd.f32 %v1753, %v1761
    %v1764 = vtanh.pop %v1763
    %1766 = vrot.lane.b32.xlu0 %v1764, 64
    %v1767 = vpop.permute.xlu0 %1766
    %v1769 = vmul.f32 %v1751, %v1767
    %v1770 = vld [vmem:[#allocation5] sm:$0xff]
    %v1771 = vld [vmem:[#allocation5 + $0x8] sm:$0xff]
    %v1772 = vld [vmem:[#allocation5 + $0x10] sm:$0xff]
    %v1773 = vld [vmem:[#allocation5 + $0x18] sm:$0xff]
    %v1774 = vld [vmem:[#allocation5 + $0x20] sm:$0xff]
    %v1775 = vld [vmem:[#allocation5 + $0x28] sm:$0xff]
    %v1776 = vld [vmem:[#allocation5 + $0x30] sm:$0xff]
    %v1777 = vld [vmem:[#allocation5 + $0x38] sm:$0xff]
    %v1778 = vld [vmem:[%s10] sm:$0x1]
    %v1780 = vperm.slane %v1778, 0
    %vm1782 = vcmask 523264
    %v1784 = vsel %vm1782, %v1769, 0
    %1786 = vmatpush.msra.mxu0 0.0
    %1787 = vmatpush.msra.mxu0 0.0
    %1788 = vmatpush.msra.mxu0 0.0
    %1789 = vmatpush.msra.mxu0 0.0
    %1790 = vmatpush.msra.mxu0 0.0
    %1791 = vmatpush.msra.mxu0 0.0
    %1792 = vmatpush.msra.mxu0 0.0
    %1793 = vmatpush.msra.mxu0 0.0
    %1794 = vmatpush.msra.mxu0 %v1777
    %1795 = vmatpush.msra.mxu0 %v1776
    %1796 = vmatpush.msra.mxu0 %v1775
    %1797 = vmatpush.msra.mxu0 %v1774
    %1798 = vmatpush.msra.mxu0 %v1773
    %1799 = vmatpush.msra.mxu0 %v1772
    %1800 = vmatpush.msra.mxu0 %v1771
    %1801 = vmatpush.msra.mxu0 %v1770
    %1802 = vmatmul.f32.gmra.mxu0 %v1784
    %v1803 = vpop.f32.mrf.mxu0
    %v1804 = vadd.f32 %v1780, %v1803
    %1805 = vdwg.mxu0
    %1806 = vst [vmem:[#allocation7] sm:$0x3] %v1804
    // Predicated region
    $region54: #{tpu_custom_call.1} parent=1 // pred_check
      _
    $region55: #{tpu_custom_call.1} parent=1 // pred_check_branch
      %1808 = sbr.rel (0) target = $region57
    $region56: #{tpu_custom_call.1} parent=1 // pred_region
      %1810 = vsyncadd [#allocation4], 0
      %s1812 = sshll.u32 [#allocation7], 4
      %s1813 = int_to_ptr.vmem [resolvable:$true] %s1812
      %s1814 = sshll.u32 %s11, 4
      %s1815 = int_to_ptr.hbm [resolvable:$true] %s1814
      %1817 = dma.vmem_to_hbm [thread:$0]  %s1813, 32, %s1815, [#allocation4]
    $region57: #{tpu_custom_call.1} parent=1 // pred_fallthru
      _
    // Predicated region
    $region58: #{tpu_custom_call.1} parent=1 // pred_check
      _
    $region59: #{tpu_custom_call.1} parent=1 // pred_check_branch
      %1819 = sbr.rel (0) target = $region61
    $region60: #{tpu_custom_call.1} parent=1 // pred_region
      %1821 = dma.done [#allocation4], 32
    $region61: #{tpu_custom_call.1} parent=1 // pred_fallthru
      _
    %1822 = vsyncpa [#allocation3], 1
    %1823 = vsyncpa [#allocation6], 1
    %1824 = vsyncpa [#allocation4], 1

</llo_original>
